<compile_context>
chip_gen: v5e
topology: v5e:2x2
jax: 0.10.0
libtpu: 0.0.40
codegen_flags: <defaults>
</compile_context>

<pallas_src>
import functools

import jax
import jax.numpy as jnp
import numpy as np
from jax.experimental import pallas as pl
from jax.experimental.pallas import tpu as pltpu


# --------------------------------------------------------------------------- #
# Kernel 1: fused RMSNorm + RoPE on Q/K, head-major split of V.
# --------------------------------------------------------------------------- #
def _qkv_prep_kernel(x_ref, tbl_ref, q_ref, k_ref, v_ref, *,
                     num_q_heads, num_kv_heads, head_dim):
    Hq, Hk, hd = num_q_heads, num_kv_heads, head_dim
    half = hd // 2
    eps = jnp.float32(1e-6)

    # Packed tables, row = absolute sequence position:
    #   [ w_q*cos | roll(w_q)*sign*sin | w_k*cos | roll(w_k)*sign*sin ]
    qcos = tbl_ref[:, 0 * hd:1 * hd]
    qsin = tbl_ref[:, 1 * hd:2 * hd]
    kcos = tbl_ref[:, 2 * hd:3 * hd]
    ksin = tbl_ref[:, 3 * hd:4 * hd]

    def rotate_half_unsigned(xh):
        # The (-1 on first half) sign of rotate_half is folded into the sin
        # tables host-side, so only the lane rotation remains here.
        if hd >= 128:
            return pltpu.roll(xh, shift=half, axis=1)          # XLU slot
        # sub-128-lane heads: static slice + concat (lane-shift copies)
        return jnp.concatenate([xh[:, half:], xh[:, :half]], axis=1)

    def norm_rope(xh, tcos, tsin):
        # OpenELMRMSNorm (weight folded into tcos/tsin) + rotary embedding, f32.
        scale = jax.lax.rsqrt(jnp.mean(xh * xh, axis=-1, keepdims=True) + eps)
        return scale * (xh * tcos + rotate_half_unsigned(xh) * tsin)

    # Per-head processing with immediate stores: nothing stays live across the
    # whole unrolled loop (this kernel is memory-bound layout/elementwise prep).
    for h in range(Hq):
        xq = x_ref[0, :, h * hd:(h + 1) * hd].astype(jnp.float32)
        q_ref[0, h] = norm_rope(xq, qcos, qsin).astype(q_ref.dtype)
    for j in range(Hk):
        xk = x_ref[0, :, (Hq + j) * hd:(Hq + j + 1) * hd].astype(jnp.float32)
        k_ref[0, j] = norm_rope(xk, kcos, ksin).astype(k_ref.dtype)
        v_ref[0, j] = x_ref[0, :, (Hq + Hk + j) * hd:
                            (Hq + Hk + j + 1) * hd].astype(v_ref.dtype)


# --------------------------------------------------------------------------- #
# Kernel 2: flash-style GQA attention, grid = (B, kv_groups, q_tiles, kv_tiles)
# --------------------------------------------------------------------------- #
def _flash_attn_kernel(q_ref, k_ref, v_ref, o_ref,
                       qs_sc, m_sc, l_sc, acc_sc, *,
                       sm_scale, matmul_dtype, approx_recip):
    ki = pl.program_id(3)
    _, G, tq, hd = q_ref.shape
    rows = G * tq

    @pl.when(ki == 0)
    def _():
        # Fold 1/sqrt(hd) into q once per (b, group, q-tile); the q_rope module
        # output stays unscaled.  Cast once to the MXU input dtype.
        qs_sc[...] = (q_ref[0].reshape(rows, hd).astype(jnp.float32)
                      * sm_scale).astype(matmul_dtype)
        m_sc[...] = jnp.full_like(m_sc, -jnp.inf)
        l_sc[...] = jnp.zeros_like(l_sc)
        acc_sc[...] = jnp.zeros_like(acc_sc)

    k = k_ref[0, 0].astype(matmul_dtype)          # (tk, hd)
    v = v_ref[0, 0].astype(matmul_dtype)          # (tk, hd)

    # Scores for the whole GQA group at once: (G*tq, hd) x (tk, hd)^T on MXU,
    # f32 accumulation, contracting the shared head_dim (no explicit k.T).
    s = jax.lax.dot_general(qs_sc[...], k, (((1,), (1,)), ((), ())),
                            preferred_element_type=jnp.float32)   # (G*tq, tk)

    # Online softmax update.
    m_prev = m_sc[...]
    m_new = jnp.maximum(m_prev, jnp.max(s, axis=-1, keepdims=True))
    alpha = jnp.exp(m_prev - m_new)
    p = jnp.exp(s - m_new)
    l_sc[...] = alpha * l_sc[...] + jnp.sum(p, axis=-1, keepdims=True)
    acc_sc[...] = alpha * acc_sc[...] + jax.lax.dot_general(
        p.astype(matmul_dtype), v, (((1,), (0,)), ((), ())),
        preferred_element_type=jnp.float32)                        # (G*tq, hd)
    m_sc[...] = m_new

    @pl.when(ki == pl.num_programs(3) - 1)
    def _():
        inv_l = pl.reciprocal(l_sc[...], approx=approx_recip)      # EUP slot
        o_ref[0] = (acc_sc[...] * inv_l).reshape(G, tq, hd).astype(o_ref.dtype)


# --------------------------------------------------------------------------- #
# Host wrapper
# --------------------------------------------------------------------------- #
def _pick_tile(size, cap):
    """Largest tile that divides `size`, is <= cap, and is 8-aligned (or full)."""
    if size <= cap:
        return size
    start = cap - (cap % 8)
    for cand in range(start, 0, -8):
        if size % cand == 0:
            return cand
    # TODO(synk): pad + mask the trailing partial tile for awkward seq lengths.
    return size


@functools.partial(jax.jit, static_argnames=(
    "num_q_heads", "num_kv_heads", "head_dim", "rope_freq_constant",
    "matmul_dtype", "q_tile", "kv_tile", "row_tile"))
def openelm_attention(hidden_states, q_norm_weight, k_norm_weight, *,
                      num_q_heads, num_kv_heads, head_dim,
                      rope_freq_constant=10000,
                      matmul_dtype=jnp.bfloat16,   # MXU input dtype (f32 accum)
                      q_tile=256, kv_tile=512, row_tile=256):
    B, S, D = hidden_states.shape
    Hq, Hk, hd = num_q_heads, num_kv_heads, head_dim
    G = Hq // Hk
    half = hd // 2
    assert D == (Hq + 2 * Hk) * hd and Hq % Hk == 0 and hd % 2 == 0
    dtype = hidden_states.dtype

    # --- RoPE tables with RMSNorm weights and rotate_half sign folded in ---
    inv_freq = 1.0 / (rope_freq_constant **
                      (jnp.arange(0, hd, 2, dtype=jnp.float32) / hd))
    theta = jnp.arange(S, dtype=jnp.float32)[:, None] * inv_freq[None, :]
    emb = jnp.concatenate([theta, theta], axis=-1)               # (S, hd)
    cos, sin = jnp.cos(emb), jnp.sin(emb)
    sign = jnp.concatenate([-jnp.ones((half,), jnp.float32),
                            jnp.ones((half,), jnp.float32)])

    def fold(w):
        w = w.astype(jnp.float32)
        w_rolled = jnp.concatenate([w[half:], w[:half]])
        return cos * w[None, :], sin * (w_rolled * sign)[None, :]

    q_cos_t, q_sin_t = fold(q_norm_weight)
    k_cos_t, k_sin_t = fold(k_norm_weight)
    tables = jnp.concatenate([q_cos_t, q_sin_t, k_cos_t, k_sin_t], axis=-1)

    # --------------------- Kernel 1: qkv norm/rope prep --------------------- #
    ts = _pick_tile(S, row_tile)
    v_dtype = matmul_dtype
    q_rope, k_rope, v_heads = pl.pallas_call(
        functools.partial(_qkv_prep_kernel, num_q_heads=Hq, num_kv_heads=Hk,
                          head_dim=hd),
        out_shape=[
            jax.ShapeDtypeStruct((B, Hq, S, hd), dtype),    # post-RoPE queries
            jax.ShapeDtypeStruct((B, Hk, S, hd), dtype),    # post-RoPE keys
            jax.ShapeDtypeStruct((B, Hk, S, hd), v_dtype),  # head-major values
        ],
        grid=(B, S // ts),
        in_specs=[
            pl.BlockSpec((1, ts, D), lambda b, t: (b, t, 0)),
            pl.BlockSpec((ts, 4 * hd), lambda b, t: (t, 0)),
        ],
        out_specs=[
            pl.BlockSpec((1, Hq, ts, hd), lambda b, t: (b, 0, t, 0)),
            pl.BlockSpec((1, Hk, ts, hd), lambda b, t: (b, 0, t, 0)),
            pl.BlockSpec((1, Hk, ts, hd), lambda b, t: (b, 0, t, 0)),
        ],
        compiler_params=pltpu.CompilerParams(
            dimension_semantics=("parallel", "parallel"),
            vmem_limit_bytes=48 * 1024 * 1024),
    )(hidden_states, tables)

    # --------------------- Kernel 2: flash GQA attention -------------------- #
    # Conservative tile caps so double-buffered blocks + scratch fit v7x's
    # 64 MiB VMEM as well as v5e/v6e; sweep q_tile/kv_tile per generation.
    tq = _pick_tile(S, q_tile)
    tk = _pick_tile(S, kv_tile)
    approx_recip = (matmul_dtype == jnp.bfloat16)   # exact recip on f32 path

    attn_heads = pl.pallas_call(
        functools.partial(_flash_attn_kernel, sm_scale=1.0 / (float(hd) ** 0.5),
                          matmul_dtype=matmul_dtype, approx_recip=approx_recip),
        out_shape=jax.ShapeDtypeStruct((B, Hq, S, hd), dtype),
        grid=(B, Hk, S // tq, S // tk),
        in_specs=[
            pl.BlockSpec((1, G, tq, hd), lambda b, j, qi, ki: (b, j, qi, 0)),
            pl.BlockSpec((1, 1, tk, hd), lambda b, j, qi, ki: (b, j, ki, 0)),
            pl.BlockSpec((1, 1, tk, hd), lambda b, j, qi, ki: (b, j, ki, 0)),
        ],
        out_specs=pl.BlockSpec((1, G, tq, hd), lambda b, j, qi, ki: (b, j, qi, 0)),
        scratch_shapes=[
            pltpu.VMEM((G * tq, hd), matmul_dtype),   # scaled q (1/sqrt(hd) folded)
            pltpu.VMEM((G * tq, 1), jnp.float32),     # running max  m
            pltpu.VMEM((G * tq, 1), jnp.float32),     # running sum  l
            pltpu.VMEM((G * tq, hd), jnp.float32),    # running acc
        ],
        compiler_params=pltpu.CompilerParams(
            dimension_semantics=("parallel", "parallel", "parallel", "arbitrary"),
            vmem_limit_bytes=48 * 1024 * 1024),
    )(q_rope, k_rope, v_heads)

    # Module output layout [B, S, Hq*hd] (same transpose the PyTorch module does).
    attn = attn_heads.transpose(0, 2, 1, 3).reshape(B, S, Hq * hd)
    return attn, q_rope, k_rope


# ----------------------------- pure-JAX reference --------------------------- #
def _reference(hidden_states, q_norm_weight, k_norm_weight, *,
               num_q_heads, num_kv_heads, head_dim, rope_freq_constant=10000):
    B, S, D = hidden_states.shape
    Hq, Hk = num_q_heads, num_kv_heads
    G = Hq // Hk
    qkv = hidden_states.reshape(B, S, Hq + 2 * Hk, head_dim).transpose(0, 2, 1, 3)
    q, k, v = qkv[:, :Hq], qkv[:, Hq:Hq + Hk], qkv[:, Hq + Hk:]

    def rms(x, w):
        x = x.astype(jnp.float32)
        return x * jax.lax.rsqrt(jnp.mean(x * x, -1, keepdims=True) + 1e-6) * w

    q = rms(q, q_norm_weight)
    k = rms(k, k_norm_weight)

    inv_freq = 1.0 / (rope_freq_constant **
                      (jnp.arange(0, head_dim, 2, dtype=jnp.float32) / head_dim))
    theta = jnp.einsum("i,j->ij", jnp.arange(S, dtype=jnp.float32), inv_freq)
    emb = jnp.concatenate([theta, theta], axis=-1)
    cos, sin = jnp.cos(emb), jnp.sin(emb)

    def rope(x):
        x1, x2 = jnp.split(x, 2, axis=-1)
        rot = jnp.concatenate([-x2, x1], axis=-1)
        return x * cos + rot * sin

    q, k = rope(q), rope(k)
    kk = jnp.repeat(k, G, axis=1)
    vv = jnp.repeat(v, G, axis=1)
    s = jnp.einsum("bhqd,bhkd->bhqk", q, kk) / jnp.sqrt(jnp.float32(head_dim))
    p = jax.nn.softmax(s, axis=-1)
    o = jnp.einsum("bhqk,bhkd->bhqd", p, vv)
    o = o.transpose(0, 2, 1, 3).reshape(B, S, Hq * head_dim)
    return o, q, k


# ----------------------------------- main ------------------------------------ #
if __name__ == "__main__":
    B, S = 2, 8
    head_dim = 32
    num_q_heads, num_kv_heads = 4, 2
    D = (num_q_heads + 2 * num_kv_heads) * head_dim   # 256

    key = jax.random.PRNGKey(0)
    k1, k2, k3 = jax.random.split(key, 3)
    hidden_states = jax.random.normal(k1, (B, S, D), dtype=jnp.float32)
    q_norm_weight = 1.0 + 0.1 * jax.random.normal(k2, (head_dim,), dtype=jnp.float32)
    k_norm_weight = 1.0 + 0.1 * jax.random.normal(k3, (head_dim,), dtype=jnp.float32)

    ref_out, ref_q, ref_k = _reference(
        hidden_states, q_norm_weight, k_norm_weight,
        num_q_heads=num_q_heads, num_kv_heads=num_kv_heads, head_dim=head_dim)

    # f32-exact MXU path: tight tolerance vs the f32 reference.
    out32, q32, k32 = openelm_attention(
        hidden_states, q_norm_weight, k_norm_weight,
        num_q_heads=num_q_heads, num_kv_heads=num_kv_heads, head_dim=head_dim,
        matmul_dtype=jnp.float32)
    jax.block_until_ready((out32, q32, k32))
    np.testing.assert_allclose(np.asarray(out32), np.asarray(ref_out), rtol=2e-5, atol=2e-5)
    np.testing.assert_allclose(np.asarray(q32), np.asarray(ref_q), rtol=2e-5, atol=2e-5)
    np.testing.assert_allclose(np.asarray(k32), np.asarray(ref_k), rtol=2e-5, atol=2e-5)

    # Default bf16-MXU path (perf-review config): looser tolerance on the
    # attention output; the RMSNorm+RoPE q/k outputs remain full f32.
    out16, q16, k16 = openelm_attention(
        hidden_states, q_norm_weight, k_norm_weight,
        num_q_heads=num_q_heads, num_kv_heads=num_kv_heads, head_dim=head_dim)
    jax.block_until_ready((out16, q16, k16))
    np.testing.assert_allclose(np.asarray(out16), np.asarray(ref_out), rtol=3e-2, atol=3e-2)
    np.testing.assert_allclose(np.asarray(q16), np.asarray(ref_q), rtol=2e-5, atol=2e-5)
    np.testing.assert_allclose(np.asarray(k16), np.asarray(ref_k), rtol=2e-5, atol=2e-5)

    print("KERNEL_OK")
</pallas_src>

<mosaic_0001>
module attributes {stable_mosaic.version = 11 : i64} {
  func.func @_qkv_prep_kernel(%arg0: i32, %arg1: i32, %arg2: memref<1x8x256xf32, #tpu.memory_space<vmem>>, %arg3: memref<8x128xf32, #tpu.memory_space<vmem>>, %arg4: memref<1x4x8x32xf32, #tpu.memory_space<vmem>>, %arg5: memref<1x2x8x32xf32, #tpu.memory_space<vmem>>, %arg6: memref<1x2x8x32xf32, #tpu.memory_space<vmem>>) attributes {dimension_semantics = [#tpu.dimension_semantics<parallel>, #tpu.dimension_semantics<parallel>], iteration_bounds = array<i64: 2, 1>, scalar_prefetch = 0 : i64, scratch_operands = 0 : i64, tpu.core_type = #tpu.core_type<tc>, window_params = [{transform_indices = @transform_0, window_bounds = array<i64: 1, 8, 256>}, {transform_indices = @transform_1, window_bounds = array<i64: 8, 128>}, {transform_indices = @transform_2, window_bounds = array<i64: 1, 4, 8, 32>}, {transform_indices = @transform_3, window_bounds = array<i64: 1, 2, 8, 32>}, {transform_indices = @transform_4, window_bounds = array<i64: 1, 2, 8, 32>}]} {
    %c0 = arith.constant 0 : index
    %c0_0 = arith.constant 0 : index
    %0 = vector.load %arg3[%c0, %c0_0] : memref<8x128xf32, #tpu.memory_space<vmem>>, vector<8x32xf32>
    %c0_1 = arith.constant 0 : index
    %c32 = arith.constant 32 : index
    %1 = vector.load %arg3[%c0_1, %c32] : memref<8x128xf32, #tpu.memory_space<vmem>>, vector<8x32xf32>
    %c0_2 = arith.constant 0 : index
    %c64 = arith.constant 64 : index
    %2 = vector.load %arg3[%c0_2, %c64] : memref<8x128xf32, #tpu.memory_space<vmem>>, vector<8x32xf32>
    %c0_3 = arith.constant 0 : index
    %c96 = arith.constant 96 : index
    %3 = vector.load %arg3[%c0_3, %c96] : memref<8x128xf32, #tpu.memory_space<vmem>>, vector<8x32xf32>
    %c0_4 = arith.constant 0 : index
    %c0_5 = arith.constant 0 : index
    %c0_6 = arith.constant 0 : index
    %4 = vector.load %arg2[%c0_4, %c0_5, %c0_6] : memref<1x8x256xf32, #tpu.memory_space<vmem>>, vector<1x8x32xf32>
    %5 = vector.shape_cast %4 : vector<1x8x32xf32> to vector<8x32xf32>
    %6 = arith.mulf %5, %5 : vector<8x32xf32>
    %cst = arith.constant dense<0.000000e+00> : vector<8xf32>
    %7 = vector.multi_reduction <add>, %6, %cst [1] : vector<8x32xf32> to vector<8xf32>
    %8 = vector.shape_cast %7 : vector<8xf32> to vector<8x1xf32>
    %cst_7 = arith.constant 3.200000e+01 : f32
    %9 = vector.broadcast %cst_7 : f32 to vector<8x1xf32>
    %10 = arith.divf %8, %9 : vector<8x1xf32>
    %cst_8 = arith.constant 9.99999997E-7 : f32
    %11 = vector.broadcast %cst_8 : f32 to vector<8x1xf32>
    %12 = arith.addf %10, %11 : vector<8x1xf32>
    %13 = math.rsqrt %12 : vector<8x1xf32>
    %14 = arith.mulf %5, %0 : vector<8x32xf32>
    %15 = vector.extract_strided_slice %5 {offsets = [0, 16], sizes = [8, 16], strides = [1, 1]} : vector<8x32xf32> to vector<8x16xf32>
    %16 = vector.extract_strided_slice %5 {offsets = [0, 0], sizes = [8, 16], strides = [1, 1]} : vector<8x32xf32> to vector<8x16xf32>
    %17 = tpu.concatenate %15, %16 in 1 : vector<8x16xf32>, vector<8x16xf32> -> vector<8x32xf32>
    %18 = arith.mulf %17, %1 : vector<8x32xf32>
    %19 = arith.addf %14, %18 : vector<8x32xf32>
    %20 = vector.broadcast %13 : vector<8x1xf32> to vector<8x32xf32>
    %21 = arith.mulf %20, %19 : vector<8x32xf32>
    %c0_9 = arith.constant 0 : index
    %c0_10 = arith.constant 0 : index
    %c0_11 = arith.constant 0 : index
    %c0_12 = arith.constant 0 : index
    %22 = vector.load %arg4[%c0_9, %c0_10, %c0_11, %c0_12] : memref<1x4x8x32xf32, #tpu.memory_space<vmem>>, vector<1x1x8x32xf32>
    %23 = vector.shape_cast %22 : vector<1x1x8x32xf32> to vector<8x32xf32>
    %24 = vector.shape_cast %21 : vector<8x32xf32> to vector<1x1x8x32xf32>
    tpu.vector_store %arg4[%c0_9, %c0_10, %c0_11, %c0_12], %24 {strides = array<i32>} : memref<1x4x8x32xf32, #tpu.memory_space<vmem>>, vector<1x1x8x32xf32>,
    %c0_13 = arith.constant 0 : index
    %c0_14 = arith.constant 0 : index
    %c32_15 = arith.constant 32 : index
    %25 = vector.load %arg2[%c0_13, %c0_14, %c32_15] : memref<1x8x256xf32, #tpu.memory_space<vmem>>, vector<1x8x32xf32>
    %26 = vector.shape_cast %25 : vector<1x8x32xf32> to vector<8x32xf32>
    %27 = arith.mulf %26, %26 : vector<8x32xf32>
    %cst_16 = arith.constant dense<0.000000e+00> : vector<8xf32>
    %28 = vector.multi_reduction <add>, %27, %cst_16 [1] : vector<8x32xf32> to vector<8xf32>
    %29 = vector.shape_cast %28 : vector<8xf32> to vector<8x1xf32>
    %cst_17 = arith.constant 3.200000e+01 : f32
    %30 = vector.broadcast %cst_17 : f32 to vector<8x1xf32>
    %31 = arith.divf %29, %30 : vector<8x1xf32>
    %cst_18 = arith.constant 9.99999997E-7 : f32
    %32 = vector.broadcast %cst_18 : f32 to vector<8x1xf32>
    %33 = arith.addf %31, %32 : vector<8x1xf32>
    %34 = math.rsqrt %33 : vector<8x1xf32>
    %35 = arith.mulf %26, %0 : vector<8x32xf32>
    %36 = vector.extract_strided_slice %26 {offsets = [0, 16], sizes = [8, 16], strides = [1, 1]} : vector<8x32xf32> to vector<8x16xf32>
    %37 = vector.extract_strided_slice %26 {offsets = [0, 0], sizes = [8, 16], strides = [1, 1]} : vector<8x32xf32> to vector<8x16xf32>
    %38 = tpu.concatenate %36, %37 in 1 : vector<8x16xf32>, vector<8x16xf32> -> vector<8x32xf32>
    %39 = arith.mulf %38, %1 : vector<8x32xf32>
    %40 = arith.addf %35, %39 : vector<8x32xf32>
    %41 = vector.broadcast %34 : vector<8x1xf32> to vector<8x32xf32>
    %42 = arith.mulf %41, %40 : vector<8x32xf32>
    %c0_19 = arith.constant 0 : index
    %c1 = arith.constant 1 : index
    %c0_20 = arith.constant 0 : index
    %c0_21 = arith.constant 0 : index
    %43 = vector.load %arg4[%c0_19, %c1, %c0_20, %c0_21] : memref<1x4x8x32xf32, #tpu.memory_space<vmem>>, vector<1x1x8x32xf32>
    %44 = vector.shape_cast %43 : vector<1x1x8x32xf32> to vector<8x32xf32>
    %45 = vector.shape_cast %42 : vector<8x32xf32> to vector<1x1x8x32xf32>
    tpu.vector_store %arg4[%c0_19, %c1, %c0_20, %c0_21], %45 {strides = array<i32>} : memref<1x4x8x32xf32, #tpu.memory_space<vmem>>, vector<1x1x8x32xf32>,
    %c0_22 = arith.constant 0 : index
    %c0_23 = arith.constant 0 : index
    %c64_24 = arith.constant 64 : index
    %46 = vector.load %arg2[%c0_22, %c0_23, %c64_24] : memref<1x8x256xf32, #tpu.memory_space<vmem>>, vector<1x8x32xf32>
    %47 = vector.shape_cast %46 : vector<1x8x32xf32> to vector<8x32xf32>
    %48 = arith.mulf %47, %47 : vector<8x32xf32>
    %cst_25 = arith.constant dense<0.000000e+00> : vector<8xf32>
    %49 = vector.multi_reduction <add>, %48, %cst_25 [1] : vector<8x32xf32> to vector<8xf32>
    %50 = vector.shape_cast %49 : vector<8xf32> to vector<8x1xf32>
    %cst_26 = arith.constant 3.200000e+01 : f32
    %51 = vector.broadcast %cst_26 : f32 to vector<8x1xf32>
    %52 = arith.divf %50, %51 : vector<8x1xf32>
    %cst_27 = arith.constant 9.99999997E-7 : f32
    %53 = vector.broadcast %cst_27 : f32 to vector<8x1xf32>
    %54 = arith.addf %52, %53 : vector<8x1xf32>
    %55 = math.rsqrt %54 : vector<8x1xf32>
    %56 = arith.mulf %47, %0 : vector<8x32xf32>
    %57 = vector.extract_strided_slice %47 {offsets = [0, 16], sizes = [8, 16], strides = [1, 1]} : vector<8x32xf32> to vector<8x16xf32>
    %58 = vector.extract_strided_slice %47 {offsets = [0, 0], sizes = [8, 16], strides = [1, 1]} : vector<8x32xf32> to vector<8x16xf32>
    %59 = tpu.concatenate %57, %58 in 1 : vector<8x16xf32>, vector<8x16xf32> -> vector<8x32xf32>
    %60 = arith.mulf %59, %1 : vector<8x32xf32>
    %61 = arith.addf %56, %60 : vector<8x32xf32>
    %62 = vector.broadcast %55 : vector<8x1xf32> to vector<8x32xf32>
    %63 = arith.mulf %62, %61 : vector<8x32xf32>
    %c0_28 = arith.constant 0 : index
    %c2 = arith.constant 2 : index
    %c0_29 = arith.constant 0 : index
    %c0_30 = arith.constant 0 : index
    %64 = vector.load %arg4[%c0_28, %c2, %c0_29, %c0_30] : memref<1x4x8x32xf32, #tpu.memory_space<vmem>>, vector<1x1x8x32xf32>
    %65 = vector.shape_cast %64 : vector<1x1x8x32xf32> to vector<8x32xf32>
    %66 = vector.shape_cast %63 : vector<8x32xf32> to vector<1x1x8x32xf32>
    tpu.vector_store %arg4[%c0_28, %c2, %c0_29, %c0_30], %66 {strides = array<i32>} : memref<1x4x8x32xf32, #tpu.memory_space<vmem>>, vector<1x1x8x32xf32>,
    %c0_31 = arith.constant 0 : index
    %c0_32 = arith.constant 0 : index
    %c96_33 = arith.constant 96 : index
    %67 = vector.load %arg2[%c0_31, %c0_32, %c96_33] : memref<1x8x256xf32, #tpu.memory_space<vmem>>, vector<1x8x32xf32>
    %68 = vector.shape_cast %67 : vector<1x8x32xf32> to vector<8x32xf32>
    %69 = arith.mulf %68, %68 : vector<8x32xf32>
    %cst_34 = arith.constant dense<0.000000e+00> : vector<8xf32>
    %70 = vector.multi_reduction <add>, %69, %cst_34 [1] : vector<8x32xf32> to vector<8xf32>
    %71 = vector.shape_cast %70 : vector<8xf32> to vector<8x1xf32>
    %cst_35 = arith.constant 3.200000e+01 : f32
    %72 = vector.broadcast %cst_35 : f32 to vector<8x1xf32>
    %73 = arith.divf %71, %72 : vector<8x1xf32>
    %cst_36 = arith.constant 9.99999997E-7 : f32
    %74 = vector.broadcast %cst_36 : f32 to vector<8x1xf32>
    %75 = arith.addf %73, %74 : vector<8x1xf32>
    %76 = math.rsqrt %75 : vector<8x1xf32>
    %77 = arith.mulf %68, %0 : vector<8x32xf32>
    %78 = vector.extract_strided_slice %68 {offsets = [0, 16], sizes = [8, 16], strides = [1, 1]} : vector<8x32xf32> to vector<8x16xf32>
    %79 = vector.extract_strided_slice %68 {offsets = [0, 0], sizes = [8, 16], strides = [1, 1]} : vector<8x32xf32> to vector<8x16xf32>
    %80 = tpu.concatenate %78, %79 in 1 : vector<8x16xf32>, vector<8x16xf32> -> vector<8x32xf32>
    %81 = arith.mulf %80, %1 : vector<8x32xf32>
    %82 = arith.addf %77, %81 : vector<8x32xf32>
    %83 = vector.broadcast %76 : vector<8x1xf32> to vector<8x32xf32>
    %84 = arith.mulf %83, %82 : vector<8x32xf32>
    %c0_37 = arith.constant 0 : index
    %c3 = arith.constant 3 : index
    %c0_38 = arith.constant 0 : index
    %c0_39 = arith.constant 0 : index
    %85 = vector.load %arg4[%c0_37, %c3, %c0_38, %c0_39] : memref<1x4x8x32xf32, #tpu.memory_space<vmem>>, vector<1x1x8x32xf32>
    %86 = vector.shape_cast %85 : vector<1x1x8x32xf32> to vector<8x32xf32>
    %87 = vector.shape_cast %84 : vector<8x32xf32> to vector<1x1x8x32xf32>
    tpu.vector_store %arg4[%c0_37, %c3, %c0_38, %c0_39], %87 {strides = array<i32>} : memref<1x4x8x32xf32, #tpu.memory_space<vmem>>, vector<1x1x8x32xf32>,
    %c0_40 = arith.constant 0 : index
    %c0_41 = arith.constant 0 : index
    %c128 = arith.constant 128 : index
    %88 = vector.load %arg2[%c0_40, %c0_41, %c128] : memref<1x8x256xf32, #tpu.memory_space<vmem>>, vector<1x8x32xf32>
    %89 = vector.shape_cast %88 : vector<1x8x32xf32> to vector<8x32xf32>
    %90 = arith.mulf %89, %89 : vector<8x32xf32>
    %cst_42 = arith.constant dense<0.000000e+00> : vector<8xf32>
    %91 = vector.multi_reduction <add>, %90, %cst_42 [1] : vector<8x32xf32> to vector<8xf32>
    %92 = vector.shape_cast %91 : vector<8xf32> to vector<8x1xf32>
    %cst_43 = arith.constant 3.200000e+01 : f32
    %93 = vector.broadcast %cst_43 : f32 to vector<8x1xf32>
    %94 = arith.divf %92, %93 : vector<8x1xf32>
    %cst_44 = arith.constant 9.99999997E-7 : f32
    %95 = vector.broadcast %cst_44 : f32 to vector<8x1xf32>
    %96 = arith.addf %94, %95 : vector<8x1xf32>
    %97 = math.rsqrt %96 : vector<8x1xf32>
    %98 = arith.mulf %89, %2 : vector<8x32xf32>
    %99 = vector.extract_strided_slice %89 {offsets = [0, 16], sizes = [8, 16], strides = [1, 1]} : vector<8x32xf32> to vector<8x16xf32>
    %100 = vector.extract_strided_slice %89 {offsets = [0, 0], sizes = [8, 16], strides = [1, 1]} : vector<8x32xf32> to vector<8x16xf32>
    %101 = tpu.concatenate %99, %100 in 1 : vector<8x16xf32>, vector<8x16xf32> -> vector<8x32xf32>
    %102 = arith.mulf %101, %3 : vector<8x32xf32>
    %103 = arith.addf %98, %102 : vector<8x32xf32>
    %104 = vector.broadcast %97 : vector<8x1xf32> to vector<8x32xf32>
    %105 = arith.mulf %104, %103 : vector<8x32xf32>
    %c0_45 = arith.constant 0 : index
    %c0_46 = arith.constant 0 : index
    %c0_47 = arith.constant 0 : index
    %c0_48 = arith.constant 0 : index
    %106 = vector.load %arg5[%c0_45, %c0_46, %c0_47, %c0_48] : memref<1x2x8x32xf32, #tpu.memory_space<vmem>>, vector<1x1x8x32xf32>
    %107 = vector.shape_cast %106 : vector<1x1x8x32xf32> to vector<8x32xf32>
    %108 = vector.shape_cast %105 : vector<8x32xf32> to vector<1x1x8x32xf32>
    tpu.vector_store %arg5[%c0_45, %c0_46, %c0_47, %c0_48], %108 {strides = array<i32>} : memref<1x2x8x32xf32, #tpu.memory_space<vmem>>, vector<1x1x8x32xf32>,
    %c0_49 = arith.constant 0 : index
    %c0_50 = arith.constant 0 : index
    %c192 = arith.constant 192 : index
    %109 = vector.load %arg2[%c0_49, %c0_50, %c192] : memref<1x8x256xf32, #tpu.memory_space<vmem>>, vector<1x8x32xf32>
    %110 = vector.shape_cast %109 : vector<1x8x32xf32> to vector<8x32xf32>
    %c0_51 = arith.constant 0 : index
    %c0_52 = arith.constant 0 : index
    %c0_53 = arith.constant 0 : index
    %c0_54 = arith.constant 0 : index
    %111 = vector.load %arg6[%c0_51, %c0_52, %c0_53, %c0_54] : memref<1x2x8x32xf32, #tpu.memory_space<vmem>>, vector<1x1x8x32xf32>
    %112 = vector.shape_cast %111 : vector<1x1x8x32xf32> to vector<8x32xf32>
    %113 = vector.shape_cast %110 : vector<8x32xf32> to vector<1x1x8x32xf32>
    tpu.vector_store %arg6[%c0_51, %c0_52, %c0_53, %c0_54], %113 {strides = array<i32>} : memref<1x2x8x32xf32, #tpu.memory_space<vmem>>, vector<1x1x8x32xf32>,
    %c0_55 = arith.constant 0 : index
    %c0_56 = arith.constant 0 : index
    %c160 = arith.constant 160 : index
    %114 = vector.load %arg2[%c0_55, %c0_56, %c160] : memref<1x8x256xf32, #tpu.memory_space<vmem>>, vector<1x8x32xf32>
    %115 = vector.shape_cast %114 : vector<1x8x32xf32> to vector<8x32xf32>
    %116 = arith.mulf %115, %115 : vector<8x32xf32>
    %cst_57 = arith.constant dense<0.000000e+00> : vector<8xf32>
    %117 = vector.multi_reduction <add>, %116, %cst_57 [1] : vector<8x32xf32> to vector<8xf32>
    %118 = vector.shape_cast %117 : vector<8xf32> to vector<8x1xf32>
    %cst_58 = arith.constant 3.200000e+01 : f32
    %119 = vector.broadcast %cst_58 : f32 to vector<8x1xf32>
    %120 = arith.divf %118, %119 : vector<8x1xf32>
    %cst_59 = arith.constant 9.99999997E-7 : f32
    %121 = vector.broadcast %cst_59 : f32 to vector<8x1xf32>
    %122 = arith.addf %120, %121 : vector<8x1xf32>
    %123 = math.rsqrt %122 : vector<8x1xf32>
    %124 = arith.mulf %115, %2 : vector<8x32xf32>
    %125 = vector.extract_strided_slice %115 {offsets = [0, 16], sizes = [8, 16], strides = [1, 1]} : vector<8x32xf32> to vector<8x16xf32>
    %126 = vector.extract_strided_slice %115 {offsets = [0, 0], sizes = [8, 16], strides = [1, 1]} : vector<8x32xf32> to vector<8x16xf32>
    %127 = tpu.concatenate %125, %126 in 1 : vector<8x16xf32>, vector<8x16xf32> -> vector<8x32xf32>
    %128 = arith.mulf %127, %3 : vector<8x32xf32>
    %129 = arith.addf %124, %128 : vector<8x32xf32>
    %130 = vector.broadcast %123 : vector<8x1xf32> to vector<8x32xf32>
    %131 = arith.mulf %130, %129 : vector<8x32xf32>
    %c0_60 = arith.constant 0 : index
    %c1_61 = arith.constant 1 : index
    %c0_62 = arith.constant 0 : index
    %c0_63 = arith.constant 0 : index
    %132 = vector.load %arg5[%c0_60, %c1_61, %c0_62, %c0_63] : memref<1x2x8x32xf32, #tpu.memory_space<vmem>>, vector<1x1x8x32xf32>
    %133 = vector.shape_cast %132 : vector<1x1x8x32xf32> to vector<8x32xf32>
    %134 = vector.shape_cast %131 : vector<8x32xf32> to vector<1x1x8x32xf32>
    tpu.vector_store %arg5[%c0_60, %c1_61, %c0_62, %c0_63], %134 {strides = array<i32>} : memref<1x2x8x32xf32, #tpu.memory_space<vmem>>, vector<1x1x8x32xf32>,
    %c0_64 = arith.constant 0 : index
    %c0_65 = arith.constant 0 : index
    %c224 = arith.constant 224 : index
    %135 = vector.load %arg2[%c0_64, %c0_65, %c224] : memref<1x8x256xf32, #tpu.memory_space<vmem>>, vector<1x8x32xf32>
    %136 = vector.shape_cast %135 : vector<1x8x32xf32> to vector<8x32xf32>
    %c0_66 = arith.constant 0 : index
    %c1_67 = arith.constant 1 : index
    %c0_68 = arith.constant 0 : index
    %c0_69 = arith.constant 0 : index
    %137 = vector.load %arg6[%c0_66, %c1_67, %c0_68, %c0_69] : memref<1x2x8x32xf32, #tpu.memory_space<vmem>>, vector<1x1x8x32xf32>
    %138 = vector.shape_cast %137 : vector<1x1x8x32xf32> to vector<8x32xf32>
    %139 = vector.shape_cast %136 : vector<8x32xf32> to vector<1x1x8x32xf32>
    tpu.vector_store %arg6[%c0_66, %c1_67, %c0_68, %c0_69], %139 {strides = array<i32>} : memref<1x2x8x32xf32, #tpu.memory_space<vmem>>, vector<1x1x8x32xf32>,
    return
  }
  func.func @transform_0(%arg0: i32, %arg1: i32) -> (i32, i32, i32) {
    %c0_i32 = arith.constant 0 : i32
    %c0_i32_0 = arith.constant 0 : i32
    return %arg0, %arg1, %c0_i32 : i32, i32, i32
  }
  func.func @transform_1(%arg0: i32, %arg1: i32) -> (i32, i32) {
    %c0_i32 = arith.constant 0 : i32
    %c0_i32_0 = arith.constant 0 : i32
    return %arg1, %c0_i32 : i32, i32
  }
  func.func @transform_2(%arg0: i32, %arg1: i32) -> (i32, i32, i32, i32) {
    %c0_i32 = arith.constant 0 : i32
    %c0_i32_0 = arith.constant 0 : i32
    %c0_i32_1 = arith.constant 0 : i32
    return %arg0, %c0_i32, %arg1, %c0_i32_0 : i32, i32, i32, i32
  }
  func.func @transform_3(%arg0: i32, %arg1: i32) -> (i32, i32, i32, i32) {
    %c0_i32 = arith.constant 0 : i32
    %c0_i32_0 = arith.constant 0 : i32
    %c0_i32_1 = arith.constant 0 : i32
    return %arg0, %c0_i32, %arg1, %c0_i32_0 : i32, i32, i32, i32
  }
  func.func @transform_4(%arg0: i32, %arg1: i32) -> (i32, i32, i32, i32) {
    %c0_i32 = arith.constant 0 : i32
    %c0_i32_0 = arith.constant 0 : i32
    %c0_i32_1 = arith.constant 0 : i32
    return %arg0, %c0_i32, %arg1, %c0_i32_0 : i32, i32, i32, i32
  }
}

module attributes {stable_mosaic.version = 11 : i64} {
  func.func @_flash_attn_kernel(%arg0: i32, %arg1: i32, %arg2: i32, %arg3: i32, %arg4: memref<1x2x8x32xf32, #tpu.memory_space<vmem>>, %arg5: memref<1x1x8x32xf32, #tpu.memory_space<vmem>>, %arg6: memref<1x1x8x32xf32, #tpu.memory_space<vmem>>, %arg7: memref<1x2x8x32xf32, #tpu.memory_space<vmem>>, %arg8: memref<16x32xf32, #tpu.memory_space<vmem>>, %arg9: memref<16x1xf32, #tpu.memory_space<vmem>>, %arg10: memref<16x1xf32, #tpu.memory_space<vmem>>, %arg11: memref<16x32xf32, #tpu.memory_space<vmem>>) attributes {dimension_semantics = [#tpu.dimension_semantics<parallel>, #tpu.dimension_semantics<parallel>, #tpu.dimension_semantics<parallel>, #tpu.dimension_semantics<arbitrary>], iteration_bounds = array<i64: 2, 2, 1, 1>, scalar_prefetch = 0 : i64, scratch_operands = 4 : i64, tpu.core_type = #tpu.core_type<tc>, window_params = [{transform_indices = @transform_0, window_bounds = array<i64: 1, 2, 8, 32>}, {transform_indices = @transform_1, window_bounds = array<i64: 1, 1, 8, 32>}, {transform_indices = @transform_2, window_bounds = array<i64: 1, 1, 8, 32>}, {transform_indices = @transform_3, window_bounds = array<i64: 1, 2, 8, 32>}]} {
    %c0_i32 = arith.constant 0 : i32
    %0 = arith.cmpi eq, %arg3, %c0_i32 : i32
    %1 = arith.extui %0 : i1 to i32
    %c0_i32_0 = arith.constant 0 : i32
    %2 = arith.cmpi ne, %1, %c0_i32_0 : i32
    scf.if %2 {
      %c0_27 = arith.constant 0 : index
      %c0_28 = arith.constant 0 : index
      %c0_29 = arith.constant 0 : index
      %c0_30 = arith.constant 0 : index
      %34 = vector.load %arg4[%c0_27, %c0_28, %c0_29, %c0_30] : memref<1x2x8x32xf32, #tpu.memory_space<vmem>>, vector<1x2x8x32xf32>
      %35 = vector.shape_cast %34 : vector<1x2x8x32xf32> to vector<2x8x32xf32>
      %36 = vector.shape_cast %35 : vector<2x8x32xf32> to vector<16x32xf32>
      %cst_31 = arith.constant 0.176776692 : f32
      %37 = vector.broadcast %cst_31 : f32 to vector<16x32xf32>
      %38 = arith.mulf %36, %37 : vector<16x32xf32>
      %c0_32 = arith.constant 0 : index
      %c0_33 = arith.constant 0 : index
      %39 = vector.load %arg8[%c0_32, %c0_33] : memref<16x32xf32, #tpu.memory_space<vmem>>, vector<16x32xf32>
      tpu.vector_store %arg8[%c0_32, %c0_33], %38 {strides = array<i32>} : memref<16x32xf32, #tpu.memory_space<vmem>>, vector<16x32xf32>,
      %cst_34 = arith.constant 0xFF800000 : f32
      %40 = vector.broadcast %cst_34 : f32 to vector<16x1xf32>
      %c0_35 = arith.constant 0 : index
      %c0_36 = arith.constant 0 : index
      %41 = vector.load %arg9[%c0_35, %c0_36] : memref<16x1xf32, #tpu.memory_space<vmem>>, vector<16x1xf32>
      tpu.vector_store %arg9[%c0_35, %c0_36], %40 {strides = array<i32>} : memref<16x1xf32, #tpu.memory_space<vmem>>, vector<16x1xf32>,
      %cst_37 = arith.constant 0.000000e+00 : f32
      %42 = vector.broadcast %cst_37 : f32 to vector<16x1xf32>
      %c0_38 = arith.constant 0 : index
      %c0_39 = arith.constant 0 : index
      %43 = vector.load %arg10[%c0_38, %c0_39] : memref<16x1xf32, #tpu.memory_space<vmem>>, vector<16x1xf32>
      tpu.vector_store %arg10[%c0_38, %c0_39], %42 {strides = array<i32>} : memref<16x1xf32, #tpu.memory_space<vmem>>, vector<16x1xf32>,
      %cst_40 = arith.constant 0.000000e+00 : f32
      %44 = vector.broadcast %cst_40 : f32 to vector<16x32xf32>
      %c0_41 = arith.constant 0 : index
      %c0_42 = arith.constant 0 : index
      %45 = vector.load %arg11[%c0_41, %c0_42] : memref<16x32xf32, #tpu.memory_space<vmem>>, vector<16x32xf32>
      tpu.vector_store %arg11[%c0_41, %c0_42], %44 {strides = array<i32>} : memref<16x32xf32, #tpu.memory_space<vmem>>, vector<16x32xf32>,
    } else {
    }
    %c0 = arith.constant 0 : index
    %c0_1 = arith.constant 0 : index
    %c0_2 = arith.constant 0 : index
    %c0_3 = arith.constant 0 : index
    %3 = vector.load %arg5[%c0, %c0_1, %c0_2, %c0_3] : memref<1x1x8x32xf32, #tpu.memory_space<vmem>>, vector<1x1x8x32xf32>
    %4 = vector.shape_cast %3 : vector<1x1x8x32xf32> to vector<8x32xf32>
    %c0_4 = arith.constant 0 : index
    %c0_5 = arith.constant 0 : index
    %c0_6 = arith.constant 0 : index
    %c0_7 = arith.constant 0 : index
    %5 = vector.load %arg6[%c0_4, %c0_5, %c0_6, %c0_7] : memref<1x1x8x32xf32, #tpu.memory_space<vmem>>, vector<1x1x8x32xf32>
    %6 = vector.shape_cast %5 : vector<1x1x8x32xf32> to vector<8x32xf32>
    %c0_8 = arith.constant 0 : index
    %c0_9 = arith.constant 0 : index
    %7 = vector.load %arg8[%c0_8, %c0_9] : memref<16x32xf32, #tpu.memory_space<vmem>>, vector<16x32xf32>
    %cst = arith.constant dense<0.000000e+00> : vector<16x8xf32>
    %8 = tpu.matmul %7, %4, %cst {dimension_numbers = #tpu.dot_dimension_numbers<[1], [1], [0], [0], [0, 0, 1, 0], [], []>} : vector<16x32xf32>, vector<8x32xf32>, vector<16x8xf32> -> vector<16x8xf32>
    %c0_10 = arith.constant 0 : index
    %c0_11 = arith.constant 0 : index
    %9 = vector.load %arg9[%c0_10, %c0_11] : memref<16x1xf32, #tpu.memory_space<vmem>>, vector<16x1xf32>
    %cst_12 = arith.constant dense<0xFF800000> : vector<16xf32>
    %10 = vector.multi_reduction <maximumf>, %8, %cst_12 [1] : vector<16x8xf32> to vector<16xf32>
    %11 = vector.shape_cast %10 : vector<16xf32> to vector<16x1xf32>
    %12 = arith.maximumf %9, %11 : vector<16x1xf32>
    %13 = arith.subf %9, %12 : vector<16x1xf32>
    %14 = math.exp %13 : vector<16x1xf32>
    %15 = vector.broadcast %12 : vector<16x1xf32> to vector<16x8xf32>
    %16 = arith.subf %8, %15 : vector<16x8xf32>
    %17 = math.exp %16 : vector<16x8xf32>
    %c0_13 = arith.constant 0 : index
    %c0_14 = arith.constant 0 : index
    %18 = vector.load %arg10[%c0_13, %c0_14] : memref<16x1xf32, #tpu.memory_space<vmem>>, vector<16x1xf32>
    %19 = arith.mulf %14, %18 : vector<16x1xf32>
    %cst_15 = arith.constant dense<0.000000e+00> : vector<16xf32>
    %20 = vector.multi_reduction <add>, %17, %cst_15 [1] : vector<16x8xf32> to vector<16xf32>
    %21 = vector.shape_cast %20 : vector<16xf32> to vector<16x1xf32>
    %22 = arith.addf %19, %21 : vector<16x1xf32>
    %c0_16 = arith.constant 0 : index
    %c0_17 = arith.constant 0 : index
    %23 = vector.load %arg10[%c0_16, %c0_17] : memref<16x1xf32, #tpu.memory_space<vmem>>, vector<16x1xf32>
    tpu.vector_store %arg10[%c0_16, %c0_17], %22 {strides = array<i32>} : memref<16x1xf32, #tpu.memory_space<vmem>>, vector<16x1xf32>,
    %c0_18 = arith.constant 0 : index
    %c0_19 = arith.constant 0 : index
    %24 = vector.load %arg11[%c0_18, %c0_19] : memref<16x32xf32, #tpu.memory_space<vmem>>, vector<16x32xf32>
    %25 = vector.broadcast %14 : vector<16x1xf32> to vector<16x32xf32>
    %26 = arith.mulf %25, %24 : vector<16x32xf32>
    %cst_20 = arith.constant dense<0.000000e+00> : vector<16x32xf32>
    %27 = tpu.matmul %17, %6, %cst_20 {dimension_numbers = #tpu.dot_dimension_numbers<[1], [0], [0], [1], [0, 0, 1, 1], [], []>} : vector<16x8xf32>, vector<8x32xf32>, vector<16x32xf32> -> vector<16x32xf32>
    %28 = arith.addf %26, %27 : vector<16x32xf32>
    %c0_21 = arith.constant 0 : index
    %c0_22 = arith.constant 0 : index
    %29 = vector.load %arg11[%c0_21, %c0_22] : memref<16x32xf32, #tpu.memory_space<vmem>>, vector<16x32xf32>
    tpu.vector_store %arg11[%c0_21, %c0_22], %28 {strides = array<i32>} : memref<16x32xf32, #tpu.memory_space<vmem>>, vector<16x32xf32>,
    %c0_23 = arith.constant 0 : index
    %c0_24 = arith.constant 0 : index
    %30 = vector.load %arg9[%c0_23, %c0_24] : memref<16x1xf32, #tpu.memory_space<vmem>>, vector<16x1xf32>
    tpu.vector_store %arg9[%c0_23, %c0_24], %12 {strides = array<i32>} : memref<16x1xf32, #tpu.memory_space<vmem>>, vector<16x1xf32>,
    %c0_i32_25 = arith.constant 0 : i32
    %31 = arith.cmpi eq, %arg3, %c0_i32_25 : i32
    %32 = arith.extui %31 : i1 to i32
    %c0_i32_26 = arith.constant 0 : i32
    %33 = arith.cmpi ne, %32, %c0_i32_26 : i32
    scf.if %33 {
      %c0_27 = arith.constant 0 : index
      %c0_28 = arith.constant 0 : index
      %34 = vector.load %arg10[%c0_27, %c0_28] : memref<16x1xf32, #tpu.memory_space<vmem>>, vector<16x1xf32>
      %35 = tpu.reciprocal %34 : vector<16x1xf32> -> vector<16x1xf32>
      %c0_29 = arith.constant 0 : index
      %c0_30 = arith.constant 0 : index
      %36 = vector.load %arg11[%c0_29, %c0_30] : memref<16x32xf32, #tpu.memory_space<vmem>>, vector<16x32xf32>
      %37 = vector.broadcast %35 : vector<16x1xf32> to vector<16x32xf32>
      %38 = arith.mulf %36, %37 : vector<16x32xf32>
      %39 = vector.shape_cast %38 : vector<16x32xf32> to vector<2x8x32xf32>
      %c0_31 = arith.constant 0 : index
      %c0_32 = arith.constant 0 : index
      %c0_33 = arith.constant 0 : index
      %c0_34 = arith.constant 0 : index
      %40 = vector.load %arg7[%c0_31, %c0_32, %c0_33, %c0_34] : memref<1x2x8x32xf32, #tpu.memory_space<vmem>>, vector<1x2x8x32xf32>
      %41 = vector.shape_cast %40 : vector<1x2x8x32xf32> to vector<2x8x32xf32>
      %42 = vector.shape_cast %39 : vector<2x8x32xf32> to vector<1x2x8x32xf32>
      tpu.vector_store %arg7[%c0_31, %c0_32, %c0_33, %c0_34], %42 {strides = array<i32>} : memref<1x2x8x32xf32, #tpu.memory_space<vmem>>, vector<1x2x8x32xf32>,
    } else {
    }
    return
  }
  func.func @transform_0(%arg0: i32, %arg1: i32, %arg2: i32, %arg3: i32) -> (i32, i32, i32, i32) {
    %c0_i32 = arith.constant 0 : i32
    %c0_i32_0 = arith.constant 0 : i32
    return %arg0, %arg1, %arg2, %c0_i32 : i32, i32, i32, i32
  }
  func.func @transform_1(%arg0: i32, %arg1: i32, %arg2: i32, %arg3: i32) -> (i32, i32, i32, i32) {
    %c0_i32 = arith.constant 0 : i32
    %c0_i32_0 = arith.constant 0 : i32
    return %arg0, %arg1, %arg3, %c0_i32 : i32, i32, i32, i32
  }
  func.func @transform_2(%arg0: i32, %arg1: i32, %arg2: i32, %arg3: i32) -> (i32, i32, i32, i32) {
    %c0_i32 = arith.constant 0 : i32
    %c0_i32_0 = arith.constant 0 : i32
    return %arg0, %arg1, %arg3, %c0_i32 : i32, i32, i32, i32
  }
  func.func @transform_3(%arg0: i32, %arg1: i32, %arg2: i32, %arg3: i32) -> (i32, i32, i32, i32) {
    %c0_i32 = arith.constant 0 : i32
    %c0_i32_0 = arith.constant 0 : i32
    return %arg0, %arg1, %arg2, %c0_i32 : i32, i32, i32, i32
  }
}

</mosaic_0001>

<llo_original>
// kernel: openelm_attention.2
$region0: #{openelm_attention.2}
  #allocation0 [shape = 'u32[]', space=smem, size = 0x4, offset = 0x4, fixed_abs, tag = 'smem constant byte address 0x4 - core index']
  #allocation1 [shape = 'u32[72,128]{1,0:T(1,128)}', space=vmem, size = 0x9000, scoped, tag = 'internal scratch']
  %s0 = inlined_call_operand.vmem [shape: f32[2,8,256], index: 0, kind: input, shape index: {}]
  %s1 = inlined_call_operand.vmem [shape: f32[8,128], index: 1, kind: input, shape index: {}]
  %s2 = inlined_call_operand.vmem [shape: f32[2,4,8,32], index: 2, kind: output, shape index: {0}]
  %s3 = inlined_call_operand.vmem [shape: f32[2,2,8,32], index: 3, kind: output, shape index: {1}]
  %s4 = inlined_call_operand.vmem [shape: f32[2,2,8,32], index: 4, kind: output, shape index: {2}]
  %5 = xla_tuple %s2, %s3, %s4
  %s6 = sld [smem:[#allocation0]]
  $region57: #{openelm_attention.2} parent=0
    _
  %s8 = ssub.s32 1, %s6
  %s9 = scalar_select 0, %s8, %s6
  loop: start=0, step=1, limit=4
  $region2: #{openelm_attention.2} parent=0 // loop_pre_header
    _
  $region3: #{openelm_attention.2} parent=0 // loop_header
    %s11 = sphi 0, %s15
    %p12 = scmp.ge.s32.totalorder %s11, 4
    %s18 = sphi 0, %s30
    %s19 = sphi 0, %s26
    %s20 = sphi 0, %s18
    %s21 = sphi 0, %s19
    %s22 = sphi 0, %s20
    %s23 = sphi 0, %s21
    %s35 = sphi 0, %s37
    %s38 = sphi 0, %s35
    %s39 = sphi 0, %s38
    %s55 = sphi 0, %s39
    %s61 = sphi 0, %s63
    %s64 = sphi 0, %s61
    %s65 = sphi 0, %s64
    %s81 = sphi 0, %s65
    %s89 = sphi 0, %s91
    %s92 = sphi 0, %s89
    %s93 = sphi 0, %s92
    %s109 = sphi 0, %s93
    %s117 = sphi 0, %s119
    %s120 = sphi 0, %s117
    %s121 = sphi 0, %s120
    %s137 = sphi 0, %s121
    %s145 = sphi 0, %s147
    %s148 = sphi 0, %s145
    %s149 = sphi 0, %s148
    %s165 = sphi 0, %s149
  $region4: #{openelm_attention.2} parent=0 // loop_header_branch
    %14 = sbr.rel (%p12) target = $region8
  $region5: #{openelm_attention.2} parent=0 // loop_body
    %s16 = ssub.s32 %s11, 1
    %s17 = ssub.s32 %s11, 2
    %s24 = sadd.s32 1, %s19
    %p25 = scmp.ge.s32.totalorder %s24, 1
    %s26 = scalar_select %p25, 0, %s24
    %s27 = sadd.s32 1, %s18
    %s28 = scalar_select %p25, %s27, %s18
    %p29 = scmp.ge.s32.totalorder %s28, 2
    %s30 = scalar_select %p29, 0, %s28
    %s31 = ssub.s32 %s18, %s30
    %s32 = ssub.s32 %s19, %s26
    %s33 = sor.u32 %s31, %s32
    %p34 = scmp.eq.s32.totalorder %s33, 0
    %s36 = sadd.s32 %s35, 1
    %s37 = scalar_select %p34, %s35, %s36
    %p40 = pneg %p34
    %p41 = scmp.eq.s32.totalorder %s11, 1
    %p42 = por %p40, %p41
    %p43 = scmp.ne.s32.totalorder %s35, %s38
    %p44 = scmp.eq.s32.totalorder %s11, 0
    %p45 = por %p43, %p44
    %p46 = scmp.ne.s32.totalorder %s35, %s38
    %p47 = scmp.eq.s32.totalorder %s16, 1
    %p48 = por %p46, %p47
    %p49 = scmp.ne.s32.totalorder %s38, %s39
    %p50 = scmp.eq.s32.totalorder %s16, 0
    %p51 = por %p49, %p50
    %p52 = scmp.ne.s32.totalorder %s38, %s39
    %p53 = scmp.eq.s32.totalorder %s17, 1
    %p54 = por %p52, %p53
    %p56 = scmp.ne.s32.totalorder %s39, %s55
    %p57 = scmp.eq.s32.totalorder %s17, 0
    %p58 = por %p56, %p57
    %s59 = ssub.s32 %s19, %s26
    %p60 = scmp.eq.s32.totalorder %s59, 0
    %s62 = sadd.s32 %s61, 1
    %s63 = scalar_select %p60, %s61, %s62
    %p66 = pneg %p60
    %p67 = scmp.eq.s32.totalorder %s11, 1
    %p68 = por %p66, %p67
    %p69 = scmp.ne.s32.totalorder %s61, %s64
    %p70 = scmp.eq.s32.totalorder %s11, 0
    %p71 = por %p69, %p70
    %p72 = scmp.ne.s32.totalorder %s61, %s64
    %p73 = scmp.eq.s32.totalorder %s16, 1
    %p74 = por %p72, %p73
    %p75 = scmp.ne.s32.totalorder %s64, %s65
    %p76 = scmp.eq.s32.totalorder %s16, 0
    %p77 = por %p75, %p76
    %p78 = scmp.ne.s32.totalorder %s64, %s65
    %p79 = scmp.eq.s32.totalorder %s17, 1
    %p80 = por %p78, %p79
    %p82 = scmp.ne.s32.totalorder %s65, %s81
    %p83 = scmp.eq.s32.totalorder %s17, 0
    %p84 = por %p82, %p83
    %s85 = ssub.s32 %s18, %s30
    %s86 = ssub.s32 %s19, %s26
    %s87 = sor.u32 %s85, %s86
    %p88 = scmp.eq.s32.totalorder %s87, 0
    %s90 = sadd.s32 %s89, 1
    %s91 = scalar_select %p88, %s89, %s90
    %p94 = pneg %p88
    %p95 = scmp.eq.s32.totalorder %s11, 1
    %p96 = por %p94, %p95
    %p97 = scmp.ne.s32.totalorder %s89, %s92
    %p98 = scmp.eq.s32.totalorder %s11, 0
    %p99 = por %p97, %p98
    %p100 = scmp.ne.s32.totalorder %s89, %s92
    %p101 = scmp.eq.s32.totalorder %s16, 1
    %p102 = por %p100, %p101
    %p103 = scmp.ne.s32.totalorder %s92, %s93
    %p104 = scmp.eq.s32.totalorder %s16, 0
    %p105 = por %p103, %p104
    %p106 = scmp.ne.s32.totalorder %s92, %s93
    %p107 = scmp.eq.s32.totalorder %s17, 1
    %p108 = por %p106, %p107
    %p110 = scmp.ne.s32.totalorder %s93, %s109
    %p111 = scmp.eq.s32.totalorder %s17, 0
    %p112 = por %p110, %p111
    %s113 = ssub.s32 %s18, %s30
    %s114 = ssub.s32 %s19, %s26
    %s115 = sor.u32 %s113, %s114
    %p116 = scmp.eq.s32.totalorder %s115, 0
    %s118 = sadd.s32 %s117, 1
    %s119 = scalar_select %p116, %s117, %s118
    %p122 = pneg %p116
    %p123 = scmp.eq.s32.totalorder %s11, 1
    %p124 = por %p122, %p123
    %p125 = scmp.ne.s32.totalorder %s117, %s120
    %p126 = scmp.eq.s32.totalorder %s11, 0
    %p127 = por %p125, %p126
    %p128 = scmp.ne.s32.totalorder %s117, %s120
    %p129 = scmp.eq.s32.totalorder %s16, 1
    %p130 = por %p128, %p129
    %p131 = scmp.ne.s32.totalorder %s120, %s121
    %p132 = scmp.eq.s32.totalorder %s16, 0
    %p133 = por %p131, %p132
    %p134 = scmp.ne.s32.totalorder %s120, %s121
    %p135 = scmp.eq.s32.totalorder %s17, 1
    %p136 = por %p134, %p135
    %p138 = scmp.ne.s32.totalorder %s121, %s137
    %p139 = scmp.eq.s32.totalorder %s17, 0
    %p140 = por %p138, %p139
    %s141 = ssub.s32 %s18, %s30
    %s142 = ssub.s32 %s19, %s26
    %s143 = sor.u32 %s141, %s142
    %p144 = scmp.eq.s32.totalorder %s143, 0
    %s146 = sadd.s32 %s145, 1
    %s147 = scalar_select %p144, %s145, %s146
    %p150 = pneg %p144
    %p151 = scmp.eq.s32.totalorder %s11, 1
    %p152 = por %p150, %p151
    %p153 = scmp.ne.s32.totalorder %s145, %s148
    %p154 = scmp.eq.s32.totalorder %s11, 0
    %p155 = por %p153, %p154
    %p156 = scmp.ne.s32.totalorder %s145, %s148
    %p157 = scmp.eq.s32.totalorder %s16, 1
    %p158 = por %p156, %p157
    %p159 = scmp.ne.s32.totalorder %s148, %s149
    %p160 = scmp.eq.s32.totalorder %s16, 0
    %p161 = por %p159, %p160
    %p162 = scmp.ne.s32.totalorder %s148, %s149
    %p163 = scmp.eq.s32.totalorder %s17, 1
    %p164 = por %p162, %p163
    %p166 = scmp.ne.s32.totalorder %s149, %s165
    %p167 = scmp.eq.s32.totalorder %s17, 0
    %p168 = por %p166, %p167
    %p169 = scmp.le.s32.totalorder 1, %s11
    %p170 = scmp.lt.s32.totalorder %s11, 3
    %p171 = pnand %p169, %p170
    %p172 = pneg %p171
    // Predicated region
    $region9: #{openelm_attention.2} parent=5 // pred_check
      _
    $region10: #{openelm_attention.2} parent=5 // pred_check_branch
      %174 = sbr.rel (%p171) target = $region12
    $region11: #{openelm_attention.2} parent=5 // pred_region
      %s175 = ssub.s32 %s11, 1
      // Predicated region
      $region13: #{openelm_attention.2} parent=11 // pred_check
        %p176 = pneg %p77
      $region14: #{openelm_attention.2} parent=11 // pred_check_branch
        %178 = sbr.rel (%p176) target = $region16
      $region15: #{openelm_attention.2} parent=11 // pred_region
        %p179 = scmp.lt.s32.totalorder %s21, 0
        %s180 = scalar_select %p179, %s21, 0
        %s181 = smul.addr %s180, 8
        %s182 = scalar_lea.vmem %s1, %s181
      $region16: #{openelm_attention.2} parent=11 // pred_fallthru
        _
    $region12: #{openelm_attention.2} parent=5 // pred_fallthru
      _
    %p183 = scmp.lt.s32.totalorder %s11, 2
    // Predicated region
    $region17: #{openelm_attention.2} parent=5 // pred_check
      %p184 = pneg %p183
    $region18: #{openelm_attention.2} parent=5 // pred_check_branch
      %186 = sbr.rel (%p184) target = $region20
    $region19: #{openelm_attention.2} parent=5 // pred_region
      // Predicated region
      $region21: #{openelm_attention.2} parent=19 // pred_check
        %p187 = pneg %p45
      $region22: #{openelm_attention.2} parent=19 // pred_check_branch
        %189 = sbr.rel (%p187) target = $region24
      $region23: #{openelm_attention.2} parent=19 // pred_region
        %p190 = scmp.lt.s32.totalorder %s18, 1
        %s191 = scalar_select %p190, %s18, 1
        %p192 = scmp.lt.s32.totalorder %s19, 0
        %s193 = scalar_select %p192, %s19, 0
        %s194 = smul.addr %s193, 2
        %s195 = smul.addr %s191, 2
        %s196 = sadd.s32 %s194, %s195
        %s197 = smul.addr %s196, 8
        %s198 = scalar_lea.vmem %s0, %s197
      $region24: #{openelm_attention.2} parent=19 // pred_fallthru
        _
    $region20: #{openelm_attention.2} parent=5 // pred_fallthru
      _
    %p199 = scmp.le.s32.totalorder 1, %s11
    %p200 = scmp.lt.s32.totalorder %s11, 3
    %p201 = pnand %p199, %p200
    %p202 = pneg %p201
    // Predicated region
    $region25: #{openelm_attention.2} parent=5 // pred_check
      _
    $region26: #{openelm_attention.2} parent=5 // pred_check_branch
      %204 = sbr.rel (%p201) target = $region28
    $region27: #{openelm_attention.2} parent=5 // pred_region
      %s205 = ssub.s32 %s11, 1
      %p206 = scmp.lt.s32.totalorder %s20, 1
      %s207 = scalar_select %p206, %s20, 1
      %p208 = scmp.lt.s32.totalorder %s21, 0
      %s209 = scalar_select %p208, %s21, 0
      %s210 = smul.addr %s209, 2
      %s211 = smul.addr %s207, 2
      %s212 = sadd.s32 %s210, %s211
      %s213 = smul.addr %s212, 8
      %s214 = scalar_lea.vmem %s0, %s213
      %p215 = pneg %p51
      %p216 = pneg %p48
      %p217 = scmp.lt.s32.totalorder %s21, 0
      %s218 = scalar_select %p217, %s21, 0
      %s219 = smul.addr %s218, 8
      %s220 = scalar_lea.vmem %s1, %s219
      %p221 = pneg %p77
      %p222 = pneg %p74
      %p223 = pneg %p105
      %p224 = pneg %p102
      %p225 = scmp.lt.s32.totalorder %s20, 1
      %s226 = scalar_select %p225, %s20, 1
      %p227 = scmp.lt.s32.totalorder %s21, 0
      %s228 = scalar_select %p227, %s21, 0
      %s229 = smul.addr %s226, 4
      %s230 = sadd.s32 %s228, %s229
      %s231 = smul.addr %s230, 8
      %s232 = scalar_lea.vmem %s2, %s231
      %p233 = pneg %p133
      %p234 = pneg %p130
      %p235 = scmp.lt.s32.totalorder %s20, 1
      %s236 = scalar_select %p235, %s20, 1
      %p237 = scmp.lt.s32.totalorder %s21, 0
      %s238 = scalar_select %p237, %s21, 0
      %s239 = smul.addr %s236, 2
      %s240 = sadd.s32 %s238, %s239
      %s241 = smul.addr %s240, 8
      %s242 = scalar_lea.vmem %s3, %s241
      %p243 = pneg %p161
      %p244 = pneg %p158
      %p245 = scmp.lt.s32.totalorder %s20, 1
      %s246 = scalar_select %p245, %s20, 1
      %p247 = scmp.lt.s32.totalorder %s21, 0
      %s248 = scalar_select %p247, %s21, 0
      %s249 = smul.addr %s246, 2
      %s250 = sadd.s32 %s248, %s249
      %s251 = smul.addr %s250, 8
      %s252 = scalar_lea.vmem %s4, %s251
      %p253 = scmp.lt.s32.totalorder %s20, 1
      %s254 = scalar_select %p253, %s20, 1
      %p255 = scmp.lt.s32.totalorder %s21, 0
      %s256 = scalar_select %p255, %s21, 0
      %s257 = smul.addr %s256, 2
      %s258 = smul.addr %s254, 2
      %s259 = sadd.s32 %s257, %s258
      %s260 = smul.addr %s259, 8
      %s261 = scalar_lea.vmem %s0, %s260
      %p262 = scmp.lt.s32.totalorder %s21, 0
      %s263 = scalar_select %p262, %s21, 0
      %s264 = smul.addr %s263, 8
      %s265 = scalar_lea.vmem %s1, %s264
      %p266 = scmp.lt.s32.totalorder %s20, 1
      %s267 = scalar_select %p266, %s20, 1
      %p268 = scmp.lt.s32.totalorder %s21, 0
      %s269 = scalar_select %p268, %s21, 0
      %s270 = smul.addr %s267, 4
      %s271 = sadd.s32 %s269, %s270
      %s272 = smul.addr %s271, 8
      %s273 = scalar_lea.vmem %s2, %s272
      %p274 = scmp.lt.s32.totalorder %s20, 1
      %s275 = scalar_select %p274, %s20, 1
      %p276 = scmp.lt.s32.totalorder %s21, 0
      %s277 = scalar_select %p276, %s21, 0
      %s278 = smul.addr %s275, 2
      %s279 = sadd.s32 %s277, %s278
      %s280 = smul.addr %s279, 8
      %s281 = scalar_lea.vmem %s3, %s280
      %p282 = scmp.lt.s32.totalorder %s20, 1
      %s283 = scalar_select %p282, %s20, 1
      %p284 = scmp.lt.s32.totalorder %s21, 0
      %s285 = scalar_select %p284, %s21, 0
      %s286 = smul.addr %s283, 2
      %s287 = sadd.s32 %s285, %s286
      %s288 = smul.addr %s287, 8
      %s289 = scalar_lea.vmem %s4, %s288
      %v290 = vld [vmem:[%s265] sm:$0xff]
      %v291 = vld [vmem:[%s261] sm:$0xff]
      %v292 = vmul.f32 %v291, %v291
      %vm293 = vcmask 261120
      %v294 = vsel %vm293, %v292, 0.0
      %295 = vadd.xlane.f32.xlu0 %v294
      %v296 = vpop.xlane.xlu0 %295
      %v297 = vrcp.pop 32.0
      %v298 = vmul.f32 32.0, %v297
      %v299 = vsub.f32 1.0, %v298
      %v300 = vmul.f32 %v297, %v299
      %v301 = vadd.f32 %v297, %v300
      %vm302 = vweird.f32 %v297
      %v303 = vsel %vm302, %v297, %v301
      %v304 = vmul.f32 %v296, %v303
      %v305 = vadd.f32 %v304, 1e-06
      %v306 = vrsqrt.pop %v305
      %v307 = vmul.f32 %v306, %v305
      %v308 = vmul.f32 %v307, %v306
      %v309 = vmul.f32 0.5, %v308
      %v310 = vsub.f32 1.5, %v309
      %v311 = vmul.f32 %v306, %v310
      %vm312 = vweird.f32 %v305
      %vm313 = vweird.f32 %v306
      %vm314 = vmor %vm312, %vm313
      %v315 = vsel %vm314, %v306, %v311
      %v316 = vmul.f32 %v291, %v290
      %318 = vrot.lane.b32.xlu0 %v291, 112
      %v319 = vpop.permute.xlu0 %318
      %321 = vrot.lane.b32.xlu0 %v291, 16
      %v322 = vpop.permute.xlu0 %321
      %vm324 = vcmask 130048
      %v325 = vsel %vm324, %v319, %v322
      %327 = vrot.lane.b32.xlu0 %v290, 96
      %v328 = vpop.permute.xlu0 %327
      %v330 = vmul.f32 %v325, %v328
      %v331 = vadd.f32 %v316, %v330
      %v332 = vmul.f32 %v315, %v331
      %333 = vst.msk [vmem:[%s273] sm:$0xff] %vm293, %v332
      %v334 = vld [vmem:[%s261] sm:$0xff]
      %v335 = vmul.f32 %v334, %v334
      %337 = vrot.lane.b32.xlu0 %v335, 96
      %v338 = vpop.permute.xlu0 %337
      %v340 = vsel %vm293, %v338, 0.0
      %341 = vadd.xlane.f32.xlu0 %v340
      %v342 = vpop.xlane.xlu0 %341
      %v343 = vmul.f32 %v342, %v303
      %v344 = vadd.f32 %v343, 1e-06
      %v345 = vrsqrt.pop %v344
      %v346 = vmul.f32 %v345, %v344
      %v347 = vmul.f32 %v346, %v345
      %v348 = vmul.f32 0.5, %v347
      %v349 = vsub.f32 1.5, %v348
      %v350 = vmul.f32 %v345, %v349
      %vm351 = vweird.f32 %v344
      %vm352 = vweird.f32 %v345
      %vm353 = vmor %vm351, %vm352
      %v354 = vsel %vm353, %v345, %v350
      %355 = vrot.lane.b32.xlu0 %v290, 32
      %v356 = vpop.permute.xlu0 %355
      %v358 = vmul.f32 %v334, %v356
      %360 = vrot.lane.b32.xlu0 %v334, 80
      %v361 = vpop.permute.xlu0 %360
      %363 = vrot.lane.b32.xlu0 %v334, 112
      %v364 = vpop.permute.xlu0 %363
      %v366 = vsel %vm324, %v361, %v364
      %v367 = vmul.f32 %v366, %v328
      %369 = vrot.lane.b32.xlu0 %v367, 32
      %v370 = vpop.permute.xlu0 %369
      %v372 = vadd.f32 %v358, %v370
      %v373 = vmul.f32 %v354, %v372
      %375 = vrot.lane.b32.xlu0 %v373, 96
      %v376 = vpop.permute.xlu0 %375
      %s378 = scalar_lea.vmem %s273, 8
      %379 = vst.msk [vmem:[%s378] sm:$0xff] %vm293, %v376
      %v380 = vld [vmem:[%s261] sm:$0xff]
      %v381 = vmul.f32 %v380, %v380
      %383 = vrot.lane.b32.xlu0 %v381, 64
      %v384 = vpop.permute.xlu0 %383
      %v386 = vsel %vm293, %v384, 0.0
      %387 = vadd.xlane.f32.xlu0 %v386
      %v388 = vpop.xlane.xlu0 %387
      %v389 = vmul.f32 %v388, %v303
      %v390 = vadd.f32 %v389, 1e-06
      %v391 = vrsqrt.pop %v390
      %v392 = vmul.f32 %v391, %v390
      %v393 = vmul.f32 %v392, %v391
      %v394 = vmul.f32 0.5, %v393
      %v395 = vsub.f32 1.5, %v394
      %v396 = vmul.f32 %v391, %v395
      %vm397 = vweird.f32 %v390
      %vm398 = vweird.f32 %v391
      %vm399 = vmor %vm397, %vm398
      %v400 = vsel %vm399, %v391, %v396
      %401 = vrot.lane.b32.xlu0 %v290, 64
      %v402 = vpop.permute.xlu0 %401
      %v404 = vmul.f32 %v380, %v402
      %406 = vrot.lane.b32.xlu0 %v380, 48
      %v407 = vpop.permute.xlu0 %406
      %409 = vrot.lane.b32.xlu0 %v380, 80
      %v410 = vpop.permute.xlu0 %409
      %v412 = vsel %vm324, %v407, %v410
      %v413 = vmul.f32 %v412, %v328
      %415 = vrot.lane.b32.xlu0 %v413, 64
      %v416 = vpop.permute.xlu0 %415
      %v418 = vadd.f32 %v404, %v416
      %v419 = vmul.f32 %v400, %v418
      %421 = vrot.lane.b32.xlu0 %v419, 64
      %v422 = vpop.permute.xlu0 %421
      %s424 = scalar_lea.vmem %s273, 16
      %425 = vst.msk [vmem:[%s424] sm:$0xff] %vm293, %v422
      %v426 = vld [vmem:[%s261] sm:$0xff]
      %v427 = vmul.f32 %v426, %v426
      %429 = vrot.lane.b32.xlu0 %v427, 32
      %v430 = vpop.permute.xlu0 %429
      %v432 = vsel %vm293, %v430, 0.0
      %433 = vadd.xlane.f32.xlu0 %v432
      %v434 = vpop.xlane.xlu0 %433
      %v435 = vmul.f32 %v434, %v303
      %v436 = vadd.f32 %v435, 1e-06
      %v437 = vrsqrt.pop %v436
      %v438 = vmul.f32 %v437, %v436
      %v439 = vmul.f32 %v438, %v437
      %v440 = vmul.f32 0.5, %v439
      %v441 = vsub.f32 1.5, %v440
      %v442 = vmul.f32 %v437, %v441
      %vm443 = vweird.f32 %v436
      %vm444 = vweird.f32 %v437
      %vm445 = vmor %vm443, %vm444
      %v446 = vsel %vm445, %v437, %v442
      %v447 = vmul.f32 %v426, %v328
      %449 = vrot.lane.b32.xlu0 %v426, 16
      %v450 = vpop.permute.xlu0 %449
      %452 = vrot.lane.b32.xlu0 %v426, 48
      %v453 = vpop.permute.xlu0 %452
      %v455 = vsel %vm324, %v450, %v453
      %v456 = vmul.f32 %v455, %v328
      %458 = vrot.lane.b32.xlu0 %v456, 96
      %v459 = vpop.permute.xlu0 %458
      %v461 = vadd.f32 %v447, %v459
      %v462 = vmul.f32 %v446, %v461
      %464 = vrot.lane.b32.xlu0 %v462, 32
      %v465 = vpop.permute.xlu0 %464
      %s467 = scalar_lea.vmem %s273, 24
      %468 = vst.msk [vmem:[%s467] sm:$0xff] %vm293, %v465
      %v469 = vld [vmem:[%s261 + $0x8] sm:$0xff]
      %v470 = vmul.f32 %v469, %v469
      %v471 = vsel %vm293, %v470, 0.0
      %472 = vadd.xlane.f32.xlu0 %v471
      %v473 = vpop.xlane.xlu0 %472
      %v474 = vmul.f32 %v473, %v303
      %v475 = vadd.f32 %v474, 1e-06
      %v476 = vrsqrt.pop %v475
      %v477 = vmul.f32 %v476, %v475
      %v478 = vmul.f32 %v477, %v476
      %v479 = vmul.f32 0.5, %v478
      %v480 = vsub.f32 1.5, %v479
      %v481 = vmul.f32 %v476, %v480
      %vm482 = vweird.f32 %v475
      %vm483 = vweird.f32 %v476
      %vm484 = vmor %vm482, %vm483
      %v485 = vsel %vm484, %v476, %v481
      %v486 = vmul.f32 %v469, %v402
      %488 = vrot.lane.b32.xlu0 %v469, 112
      %v489 = vpop.permute.xlu0 %488
      %491 = vrot.lane.b32.xlu0 %v469, 16
      %v492 = vpop.permute.xlu0 %491
      %v494 = vsel %vm324, %v489, %v492
      %v495 = vmul.f32 %v494, %v356
      %v496 = vadd.f32 %v486, %v495
      %v497 = vmul.f32 %v485, %v496
      %498 = vst.msk [vmem:[%s281] sm:$0xff] %vm293, %v497
      %v499 = vld [vmem:[%s261 + $0x8] sm:$0xff]
      %501 = vrot.lane.b32.xlu0 %v499, 64
      %v502 = vpop.permute.xlu0 %501
      %504 = vst.msk [vmem:[%s289] sm:$0xff] %vm293, %v502
      %v505 = vld [vmem:[%s261 + $0x8] sm:$0xff]
      %v506 = vmul.f32 %v505, %v505
      %508 = vrot.lane.b32.xlu0 %v506, 96
      %v509 = vpop.permute.xlu0 %508
      %v511 = vsel %vm293, %v509, 0.0
      %512 = vadd.xlane.f32.xlu0 %v511
      %v513 = vpop.xlane.xlu0 %512
      %v514 = vmul.f32 %v513, %v303
      %v515 = vadd.f32 %v514, 1e-06
      %v516 = vrsqrt.pop %v515
      %v517 = vmul.f32 %v516, %v515
      %v518 = vmul.f32 %v517, %v516
      %v519 = vmul.f32 0.5, %v518
      %v520 = vsub.f32 1.5, %v519
      %v521 = vmul.f32 %v516, %v520
      %vm522 = vweird.f32 %v515
      %vm523 = vweird.f32 %v516
      %vm524 = vmor %vm522, %vm523
      %v525 = vsel %vm524, %v516, %v521
      %v526 = vmul.f32 %v505, %v328
      %528 = vrot.lane.b32.xlu0 %v505, 80
      %v529 = vpop.permute.xlu0 %528
      %531 = vrot.lane.b32.xlu0 %v505, 112
      %v532 = vpop.permute.xlu0 %531
      %v534 = vsel %vm324, %v529, %v532
      %v535 = vmul.f32 %v534, %v356
      %537 = vrot.lane.b32.xlu0 %v535, 32
      %v538 = vpop.permute.xlu0 %537
      %v540 = vadd.f32 %v526, %v538
      %v541 = vmul.f32 %v525, %v540
      %543 = vrot.lane.b32.xlu0 %v541, 96
      %v544 = vpop.permute.xlu0 %543
      %s546 = scalar_lea.vmem %s281, 8
      %547 = vst.msk [vmem:[%s546] sm:$0xff] %vm293, %v544
      %v548 = vld [vmem:[%s261 + $0x8] sm:$0xff]
      %550 = vrot.lane.b32.xlu0 %v548, 32
      %v551 = vpop.permute.xlu0 %550
      %s553 = scalar_lea.vmem %s289, 8
      %554 = vst.msk [vmem:[%s553] sm:$0xff] %vm293, %v551
      %p555 = scmp.lt.s32.totalorder %s20, 1
      %s556 = scalar_select %p555, %s20, 1
      %p557 = scmp.lt.s32.totalorder %s21, 0
      %s558 = scalar_select %p557, %s21, 0
      %s559 = smul.addr %s556, 4
      %s560 = sadd.s32 %s558, %s559
      %s561 = smul.addr %s560, 8
      %s562 = scalar_lea.vmem %s2, %s561
      %p563 = scmp.lt.s32.totalorder %s20, 1
      %s564 = scalar_select %p563, %s20, 1
      %p565 = scmp.lt.s32.totalorder %s21, 0
      %s566 = scalar_select %p565, %s21, 0
      %s567 = smul.addr %s564, 2
      %s568 = sadd.s32 %s566, %s567
      %s569 = smul.addr %s568, 8
      %s570 = scalar_lea.vmem %s3, %s569
      %p571 = scmp.lt.s32.totalorder %s20, 1
      %s572 = scalar_select %p571, %s20, 1
      %p573 = scmp.lt.s32.totalorder %s21, 0
      %s574 = scalar_select %p573, %s21, 0
      %s575 = smul.addr %s572, 2
      %s576 = sadd.s32 %s574, %s575
      %s577 = smul.addr %s576, 8
      %s578 = scalar_lea.vmem %s4, %s577
      // Predicated region
      $region29: #{openelm_attention.2} parent=27 // pred_check
        %p579 = pneg %p102
      $region30: #{openelm_attention.2} parent=27 // pred_check_branch
        %581 = sbr.rel (%p579) target = $region32
      $region31: #{openelm_attention.2} parent=27 // pred_region
        _
      $region32: #{openelm_attention.2} parent=27 // pred_fallthru
        _
      // Predicated region
      $region33: #{openelm_attention.2} parent=27 // pred_check
        %p582 = pneg %p130
      $region34: #{openelm_attention.2} parent=27 // pred_check_branch
        %584 = sbr.rel (%p582) target = $region36
      $region35: #{openelm_attention.2} parent=27 // pred_region
        _
      $region36: #{openelm_attention.2} parent=27 // pred_fallthru
        _
      // Predicated region
      $region37: #{openelm_attention.2} parent=27 // pred_check
        %p585 = pneg %p158
      $region38: #{openelm_attention.2} parent=27 // pred_check_branch
        %587 = sbr.rel (%p585) target = $region40
      $region39: #{openelm_attention.2} parent=27 // pred_region
        _
      $region40: #{openelm_attention.2} parent=27 // pred_fallthru
        _
    $region28: #{openelm_attention.2} parent=5 // pred_fallthru
      _
    %p588 = scmp.le.s32.totalorder 2, %s11
    // Predicated region
    $region41: #{openelm_attention.2} parent=5 // pred_check
      %p589 = pneg %p588
    $region42: #{openelm_attention.2} parent=5 // pred_check_branch
      %591 = sbr.rel (%p589) target = $region44
    $region43: #{openelm_attention.2} parent=5 // pred_region
      %s592 = ssub.s32 %s11, 2
      // Predicated region
      $region45: #{openelm_attention.2} parent=43 // pred_check
        %p593 = pneg %p108
      $region46: #{openelm_attention.2} parent=43 // pred_check_branch
        %595 = sbr.rel (%p593) target = $region48
      $region47: #{openelm_attention.2} parent=43 // pred_region
        %p596 = scmp.lt.s32.totalorder %s22, 1
        %s597 = scalar_select %p596, %s22, 1
        %p598 = scmp.lt.s32.totalorder %s23, 0
        %s599 = scalar_select %p598, %s23, 0
        %s600 = smul.addr %s597, 4
        %s601 = sadd.s32 %s599, %s600
        %s602 = smul.addr %s601, 8
        %s603 = scalar_lea.vmem %s2, %s602
      $region48: #{openelm_attention.2} parent=43 // pred_fallthru
        _
      // Predicated region
      $region49: #{openelm_attention.2} parent=43 // pred_check
        %p604 = pneg %p136
      $region50: #{openelm_attention.2} parent=43 // pred_check_branch
        %606 = sbr.rel (%p604) target = $region52
      $region51: #{openelm_attention.2} parent=43 // pred_region
        %p607 = scmp.lt.s32.totalorder %s22, 1
        %s608 = scalar_select %p607, %s22, 1
        %p609 = scmp.lt.s32.totalorder %s23, 0
        %s610 = scalar_select %p609, %s23, 0
        %s611 = smul.addr %s608, 2
        %s612 = sadd.s32 %s610, %s611
        %s613 = smul.addr %s612, 8
        %s614 = scalar_lea.vmem %s3, %s613
      $region52: #{openelm_attention.2} parent=43 // pred_fallthru
        _
      // Predicated region
      $region53: #{openelm_attention.2} parent=43 // pred_check
        %p615 = pneg %p164
      $region54: #{openelm_attention.2} parent=43 // pred_check_branch
        %617 = sbr.rel (%p615) target = $region56
      $region55: #{openelm_attention.2} parent=43 // pred_region
        %p618 = scmp.lt.s32.totalorder %s22, 1
        %s619 = scalar_select %p618, %s22, 1
        %p620 = scmp.lt.s32.totalorder %s23, 0
        %s621 = scalar_select %p620, %s23, 0
        %s622 = smul.addr %s619, 2
        %s623 = sadd.s32 %s621, %s622
        %s624 = smul.addr %s623, 8
        %s625 = scalar_lea.vmem %s4, %s624
      $region56: #{openelm_attention.2} parent=43 // pred_fallthru
        _
    $region44: #{openelm_attention.2} parent=5 // pred_fallthru
      _
  $region6: #{openelm_attention.2} parent=0 // loop_footer
    %s15 = sadd.s32 1, %s11
  $region7: #{openelm_attention.2} parent=0 // loop_footer_branch
    %10 = sbr.rel target = $region3
  $region8: #{openelm_attention.2} parent=0 // loop_exit
    _

// kernel: openelm_attention.3
$region0: #{openelm_attention.3}
  #allocation0 [shape = 'u32[]', space=smem, size = 0x4, offset = 0x4, fixed_abs, tag = 'smem constant byte address 0x4 - core index']
  #allocation1 [shape = 'u32[72,128]{1,0:T(1,128)}', space=vmem, size = 0x9000, scoped, tag = 'internal scratch']
  #allocation2 [shape = 'f32[16,32]{1,0:T(8,128)}', space=vmem, size = 0x2000, scoped, tag = 'scratch operand']
  #allocation3 [shape = 'f32[16,1]{1,0:T(8,128)}', space=vmem, size = 0x2000, scoped, tag = 'scratch operand']
  #allocation4 [shape = 'f32[16,1]{1,0:T(8,128)}', space=vmem, size = 0x2000, scoped, tag = 'scratch operand']
  #allocation5 [shape = 'f32[16,32]{1,0:T(8,128)}', space=vmem, size = 0x2000, scoped, tag = 'scratch operand']
  %s0 = inlined_call_operand.vmem [shape: f32[2,4,8,32], index: 0, kind: input, shape index: {}]
  %s1 = inlined_call_operand.vmem [shape: f32[2,2,8,32], index: 1, kind: input, shape index: {}]
  %s2 = inlined_call_operand.vmem [shape: f32[2,2,8,32], index: 2, kind: input, shape index: {}]
  %s3 = inlined_call_operand.vmem [shape: f32[2,4,8,32], index: 3, kind: output, shape index: {}]
  %s4 = sld [smem:[#allocation0]]
  $region53: #{openelm_attention.3} parent=0
    _
  %s6 = ssub.s32 1, %s4
  %s7 = scalar_select 0, %s6, %s4
  loop: start=0, step=1, limit=6
  $region2: #{openelm_attention.3} parent=0 // loop_pre_header
    _
  $region3: #{openelm_attention.3} parent=0 // loop_header
    %s9 = sphi 0, %s13
    %p10 = scmp.ge.s32.totalorder %s9, 6
    %s16 = sphi 0, %s42
    %s17 = sphi 0, %s38
    %s18 = sphi 0, %s34
    %s19 = sphi 0, %s30
    %s20 = sphi 0, %s16
    %s21 = sphi 0, %s17
    %s22 = sphi 0, %s18
    %s23 = sphi 0, %s19
    %s24 = sphi 0, %s20
    %s25 = sphi 0, %s21
    %s26 = sphi 0, %s22
    %s27 = sphi 0, %s23
    %s49 = sphi 0, %s51
    %s52 = sphi 0, %s49
    %s53 = sphi 0, %s52
    %s69 = sphi 0, %s53
    %s79 = sphi 0, %s81
    %s82 = sphi 0, %s79
    %s83 = sphi 0, %s82
    %s99 = sphi 0, %s83
    %s109 = sphi 0, %s111
    %s112 = sphi 0, %s109
    %s113 = sphi 0, %s112
    %s129 = sphi 0, %s113
    %s139 = sphi 0, %s141
    %s142 = sphi 0, %s139
    %s143 = sphi 0, %s142
    %s159 = sphi 0, %s143
  $region4: #{openelm_attention.3} parent=0 // loop_header_branch
    %12 = sbr.rel (%p10) target = $region8
  $region5: #{openelm_attention.3} parent=0 // loop_body
    %s14 = ssub.s32 %s9, 1
    %s15 = ssub.s32 %s9, 2
    %s28 = sadd.s32 1, %s19
    %p29 = scmp.ge.s32.totalorder %s28, 1
    %s30 = scalar_select %p29, 0, %s28
    %s31 = sadd.s32 1, %s18
    %s32 = scalar_select %p29, %s31, %s18
    %p33 = scmp.ge.s32.totalorder %s32, 1
    %s34 = scalar_select %p33, 0, %s32
    %s35 = sadd.s32 1, %s17
    %s36 = scalar_select %p33, %s35, %s17
    %p37 = scmp.ge.s32.totalorder %s36, 2
    %s38 = scalar_select %p37, 0, %s36
    %s39 = sadd.s32 1, %s16
    %s40 = scalar_select %p37, %s39, %s16
    %p41 = scmp.ge.s32.totalorder %s40, 2
    %s42 = scalar_select %p41, 0, %s40
    %s43 = ssub.s32 %s16, %s42
    %s44 = ssub.s32 %s17, %s38
    %s45 = sor.u32 %s43, %s44
    %s46 = ssub.s32 %s18, %s34
    %s47 = sor.u32 %s45, %s46
    %p48 = scmp.eq.s32.totalorder %s47, 0
    %s50 = sadd.s32 %s49, 1
    %s51 = scalar_select %p48, %s49, %s50
    %p54 = pneg %p48
    %p55 = scmp.eq.s32.totalorder %s9, 3
    %p56 = por %p54, %p55
    %p57 = scmp.ne.s32.totalorder %s49, %s52
    %p58 = scmp.eq.s32.totalorder %s9, 0
    %p59 = por %p57, %p58
    %p60 = scmp.ne.s32.totalorder %s49, %s52
    %p61 = scmp.eq.s32.totalorder %s14, 3
    %p62 = por %p60, %p61
    %p63 = scmp.ne.s32.totalorder %s52, %s53
    %p64 = scmp.eq.s32.totalorder %s14, 0
    %p65 = por %p63, %p64
    %p66 = scmp.ne.s32.totalorder %s52, %s53
    %p67 = scmp.eq.s32.totalorder %s15, 3
    %p68 = por %p66, %p67
    %p70 = scmp.ne.s32.totalorder %s53, %s69
    %p71 = scmp.eq.s32.totalorder %s15, 0
    %p72 = por %p70, %p71
    %s73 = ssub.s32 %s16, %s42
    %s74 = ssub.s32 %s17, %s38
    %s75 = sor.u32 %s73, %s74
    %s76 = ssub.s32 %s19, %s30
    %s77 = sor.u32 %s75, %s76
    %p78 = scmp.eq.s32.totalorder %s77, 0
    %s80 = sadd.s32 %s79, 1
    %s81 = scalar_select %p78, %s79, %s80
    %p84 = pneg %p78
    %p85 = scmp.eq.s32.totalorder %s9, 3
    %p86 = por %p84, %p85
    %p87 = scmp.ne.s32.totalorder %s79, %s82
    %p88 = scmp.eq.s32.totalorder %s9, 0
    %p89 = por %p87, %p88
    %p90 = scmp.ne.s32.totalorder %s79, %s82
    %p91 = scmp.eq.s32.totalorder %s14, 3
    %p92 = por %p90, %p91
    %p93 = scmp.ne.s32.totalorder %s82, %s83
    %p94 = scmp.eq.s32.totalorder %s14, 0
    %p95 = por %p93, %p94
    %p96 = scmp.ne.s32.totalorder %s82, %s83
    %p97 = scmp.eq.s32.totalorder %s15, 3
    %p98 = por %p96, %p97
    %p100 = scmp.ne.s32.totalorder %s83, %s99
    %p101 = scmp.eq.s32.totalorder %s15, 0
    %p102 = por %p100, %p101
    %s103 = ssub.s32 %s16, %s42
    %s104 = ssub.s32 %s17, %s38
    %s105 = sor.u32 %s103, %s104
    %s106 = ssub.s32 %s19, %s30
    %s107 = sor.u32 %s105, %s106
    %p108 = scmp.eq.s32.totalorder %s107, 0
    %s110 = sadd.s32 %s109, 1
    %s111 = scalar_select %p108, %s109, %s110
    %p114 = pneg %p108
    %p115 = scmp.eq.s32.totalorder %s9, 3
    %p116 = por %p114, %p115
    %p117 = scmp.ne.s32.totalorder %s109, %s112
    %p118 = scmp.eq.s32.totalorder %s9, 0
    %p119 = por %p117, %p118
    %p120 = scmp.ne.s32.totalorder %s109, %s112
    %p121 = scmp.eq.s32.totalorder %s14, 3
    %p122 = por %p120, %p121
    %p123 = scmp.ne.s32.totalorder %s112, %s113
    %p124 = scmp.eq.s32.totalorder %s14, 0
    %p125 = por %p123, %p124
    %p126 = scmp.ne.s32.totalorder %s112, %s113
    %p127 = scmp.eq.s32.totalorder %s15, 3
    %p128 = por %p126, %p127
    %p130 = scmp.ne.s32.totalorder %s113, %s129
    %p131 = scmp.eq.s32.totalorder %s15, 0
    %p132 = por %p130, %p131
    %s133 = ssub.s32 %s16, %s42
    %s134 = ssub.s32 %s17, %s38
    %s135 = sor.u32 %s133, %s134
    %s136 = ssub.s32 %s18, %s34
    %s137 = sor.u32 %s135, %s136
    %p138 = scmp.eq.s32.totalorder %s137, 0
    %s140 = sadd.s32 %s139, 1
    %s141 = scalar_select %p138, %s139, %s140
    %p144 = pneg %p138
    %p145 = scmp.eq.s32.totalorder %s9, 3
    %p146 = por %p144, %p145
    %p147 = scmp.ne.s32.totalorder %s139, %s142
    %p148 = scmp.eq.s32.totalorder %s9, 0
    %p149 = por %p147, %p148
    %p150 = scmp.ne.s32.totalorder %s139, %s142
    %p151 = scmp.eq.s32.totalorder %s14, 3
    %p152 = por %p150, %p151
    %p153 = scmp.ne.s32.totalorder %s142, %s143
    %p154 = scmp.eq.s32.totalorder %s14, 0
    %p155 = por %p153, %p154
    %p156 = scmp.ne.s32.totalorder %s142, %s143
    %p157 = scmp.eq.s32.totalorder %s15, 3
    %p158 = por %p156, %p157
    %p160 = scmp.ne.s32.totalorder %s143, %s159
    %p161 = scmp.eq.s32.totalorder %s15, 0
    %p162 = por %p160, %p161
    %p163 = scmp.le.s32.totalorder 1, %s9
    %p164 = scmp.lt.s32.totalorder %s9, 5
    %p165 = pnand %p163, %p164
    %p166 = pneg %p165
    // Predicated region
    $region9: #{openelm_attention.3} parent=5 // pred_check
      _
    $region10: #{openelm_attention.3} parent=5 // pred_check_branch
      %168 = sbr.rel (%p165) target = $region12
    $region11: #{openelm_attention.3} parent=5 // pred_region
      %s169 = ssub.s32 %s9, 1
    $region12: #{openelm_attention.3} parent=5 // pred_fallthru
      _
    %p170 = scmp.lt.s32.totalorder %s9, 4
    // Predicated region
    $region13: #{openelm_attention.3} parent=5 // pred_check
      %p171 = pneg %p170
    $region14: #{openelm_attention.3} parent=5 // pred_check_branch
      %173 = sbr.rel (%p171) target = $region16
    $region15: #{openelm_attention.3} parent=5 // pred_region
      // Predicated region
      $region17: #{openelm_attention.3} parent=15 // pred_check
        %p174 = pneg %p59
      $region18: #{openelm_attention.3} parent=15 // pred_check_branch
        %176 = sbr.rel (%p174) target = $region20
      $region19: #{openelm_attention.3} parent=15 // pred_region
        %s177 = smul.u32 2, %s17
        %p178 = scmp.lt.s32.totalorder %s16, 1
        %s179 = scalar_select %p178, %s16, 1
        %p180 = scmp.lt.s32.totalorder %s177, 3
        %s181 = scalar_select %p180, %s177, 3
        %p182 = scmp.lt.s32.totalorder %s18, 0
        %s183 = scalar_select %p182, %s18, 0
        %s184 = sadd.s32 %s183, %s181
        %s185 = smul.addr %s179, 4
        %s186 = sadd.s32 %s184, %s185
        %s187 = smul.addr %s186, 8
        %s188 = scalar_lea.vmem %s0, %s187
        %s189 = smul.u32 2, %s17
      $region20: #{openelm_attention.3} parent=15 // pred_fallthru
        _
      // Predicated region
      $region21: #{openelm_attention.3} parent=15 // pred_check
        %p190 = pneg %p89
      $region22: #{openelm_attention.3} parent=15 // pred_check_branch
        %192 = sbr.rel (%p190) target = $region24
      $region23: #{openelm_attention.3} parent=15 // pred_region
        %p193 = scmp.lt.s32.totalorder %s16, 1
        %s194 = scalar_select %p193, %s16, 1
        %p195 = scmp.lt.s32.totalorder %s17, 1
        %s196 = scalar_select %p195, %s17, 1
        %p197 = scmp.lt.s32.totalorder %s19, 0
        %s198 = scalar_select %p197, %s19, 0
        %s199 = sadd.s32 %s198, %s196
        %s200 = smul.addr %s194, 2
        %s201 = sadd.s32 %s199, %s200
        %s202 = smul.addr %s201, 8
        %s203 = scalar_lea.vmem %s1, %s202
      $region24: #{openelm_attention.3} parent=15 // pred_fallthru
        _
      // Predicated region
      $region25: #{openelm_attention.3} parent=15 // pred_check
        %p204 = pneg %p119
      $region26: #{openelm_attention.3} parent=15 // pred_check_branch
        %206 = sbr.rel (%p204) target = $region28
      $region27: #{openelm_attention.3} parent=15 // pred_region
        %p207 = scmp.lt.s32.totalorder %s16, 1
        %s208 = scalar_select %p207, %s16, 1
        %p209 = scmp.lt.s32.totalorder %s17, 1
        %s210 = scalar_select %p209, %s17, 1
        %p211 = scmp.lt.s32.totalorder %s19, 0
        %s212 = scalar_select %p211, %s19, 0
        %s213 = sadd.s32 %s212, %s210
        %s214 = smul.addr %s208, 2
        %s215 = sadd.s32 %s213, %s214
        %s216 = smul.addr %s215, 8
        %s217 = scalar_lea.vmem %s2, %s216
      $region28: #{openelm_attention.3} parent=15 // pred_fallthru
        _
    $region16: #{openelm_attention.3} parent=5 // pred_fallthru
      _
    %p218 = scmp.le.s32.totalorder 1, %s9
    %p219 = scmp.lt.s32.totalorder %s9, 5
    %p220 = pnand %p218, %p219
    %p221 = pneg %p220
    // Predicated region
    $region29: #{openelm_attention.3} parent=5 // pred_check
      _
    $region30: #{openelm_attention.3} parent=5 // pred_check_branch
      %223 = sbr.rel (%p220) target = $region32
    $region31: #{openelm_attention.3} parent=5 // pred_region
      %s224 = ssub.s32 %s9, 1
      %s225 = smul.u32 2, %s21
      %p226 = scmp.lt.s32.totalorder %s20, 1
      %s227 = scalar_select %p226, %s20, 1
      %p228 = scmp.lt.s32.totalorder %s225, 3
      %s229 = scalar_select %p228, %s225, 3
      %p230 = scmp.lt.s32.totalorder %s22, 0
      %s231 = scalar_select %p230, %s22, 0
      %s232 = sadd.s32 %s231, %s229
      %s233 = smul.addr %s227, 4
      %s234 = sadd.s32 %s232, %s233
      %s235 = smul.addr %s234, 8
      %s236 = scalar_lea.vmem %s0, %s235
      %p237 = pneg %p65
      %p238 = pneg %p62
      %p239 = scmp.lt.s32.totalorder %s20, 1
      %s240 = scalar_select %p239, %s20, 1
      %p241 = scmp.lt.s32.totalorder %s21, 1
      %s242 = scalar_select %p241, %s21, 1
      %p243 = scmp.lt.s32.totalorder %s23, 0
      %s244 = scalar_select %p243, %s23, 0
      %s245 = sadd.s32 %s244, %s242
      %s246 = smul.addr %s240, 2
      %s247 = sadd.s32 %s245, %s246
      %s248 = smul.addr %s247, 8
      %s249 = scalar_lea.vmem %s1, %s248
      %p250 = pneg %p95
      %p251 = pneg %p92
      %p252 = scmp.lt.s32.totalorder %s20, 1
      %s253 = scalar_select %p252, %s20, 1
      %p254 = scmp.lt.s32.totalorder %s21, 1
      %s255 = scalar_select %p254, %s21, 1
      %p256 = scmp.lt.s32.totalorder %s23, 0
      %s257 = scalar_select %p256, %s23, 0
      %s258 = sadd.s32 %s257, %s255
      %s259 = smul.addr %s253, 2
      %s260 = sadd.s32 %s258, %s259
      %s261 = smul.addr %s260, 8
      %s262 = scalar_lea.vmem %s2, %s261
      %p263 = pneg %p125
      %p264 = pneg %p122
      %p265 = pneg %p155
      %p266 = pneg %p152
      %s267 = smul.u32 2, %s21
      %p268 = scmp.lt.s32.totalorder %s20, 1
      %s269 = scalar_select %p268, %s20, 1
      %p270 = scmp.lt.s32.totalorder %s267, 3
      %s271 = scalar_select %p270, %s267, 3
      %p272 = scmp.lt.s32.totalorder %s22, 0
      %s273 = scalar_select %p272, %s22, 0
      %s274 = sadd.s32 %s273, %s271
      %s275 = smul.addr %s269, 4
      %s276 = sadd.s32 %s274, %s275
      %s277 = smul.addr %s276, 8
      %s278 = scalar_lea.vmem %s3, %s277
      %s279 = smul.u32 2, %s21
      %p280 = scmp.lt.s32.totalorder %s20, 1
      %s281 = scalar_select %p280, %s20, 1
      %p282 = scmp.lt.s32.totalorder %s279, 3
      %s283 = scalar_select %p282, %s279, 3
      %p284 = scmp.lt.s32.totalorder %s22, 0
      %s285 = scalar_select %p284, %s22, 0
      %s286 = sadd.s32 %s285, %s283
      %s287 = smul.addr %s281, 4
      %s288 = sadd.s32 %s286, %s287
      %s289 = smul.addr %s288, 8
      %s290 = scalar_lea.vmem %s0, %s289
      %s291 = smul.u32 2, %s21
      %p292 = scmp.lt.s32.totalorder %s20, 1
      %s293 = scalar_select %p292, %s20, 1
      %p294 = scmp.lt.s32.totalorder %s21, 1
      %s295 = scalar_select %p294, %s21, 1
      %p296 = scmp.lt.s32.totalorder %s23, 0
      %s297 = scalar_select %p296, %s23, 0
      %s298 = sadd.s32 %s297, %s295
      %s299 = smul.addr %s293, 2
      %s300 = sadd.s32 %s298, %s299
      %s301 = smul.addr %s300, 8
      %s302 = scalar_lea.vmem %s1, %s301
      %p303 = scmp.lt.s32.totalorder %s20, 1
      %s304 = scalar_select %p303, %s20, 1
      %p305 = scmp.lt.s32.totalorder %s21, 1
      %s306 = scalar_select %p305, %s21, 1
      %p307 = scmp.lt.s32.totalorder %s23, 0
      %s308 = scalar_select %p307, %s23, 0
      %s309 = sadd.s32 %s308, %s306
      %s310 = smul.addr %s304, 2
      %s311 = sadd.s32 %s309, %s310
      %s312 = smul.addr %s311, 8
      %s313 = scalar_lea.vmem %s2, %s312
      %s314 = smul.u32 2, %s21
      %p315 = scmp.lt.s32.totalorder %s20, 1
      %s316 = scalar_select %p315, %s20, 1
      %p317 = scmp.lt.s32.totalorder %s314, 3
      %s318 = scalar_select %p317, %s314, 3
      %p319 = scmp.lt.s32.totalorder %s22, 0
      %s320 = scalar_select %p319, %s22, 0
      %s321 = sadd.s32 %s320, %s318
      %s322 = smul.addr %s316, 4
      %s323 = sadd.s32 %s321, %s322
      %s324 = smul.addr %s323, 8
      %s325 = scalar_lea.vmem %s3, %s324
      %s326 = smul.u32 2, %s21
      %p327 = scmp.eq.s32.totalorder %s23, 0
      // Predicated region
      $region33: #{openelm_attention.3} parent=31 // pred_check
        %p328 = pneg %p327
      $region34: #{openelm_attention.3} parent=31 // pred_check_branch
        %330 = sbr.rel (%p328) target = $region36
      $region35: #{openelm_attention.3} parent=31 // pred_region
        %v331 = vld [vmem:[%s290] sm:$0xff]
        %v332 = vld [vmem:[%s290 + $0x8] sm:$0xff]
        %v333 = vmul.f32 %v331, 0.17677669
        %v334 = vmul.f32 %v332, 0.17677669
        %vm335 = vcmask 261120
        %336 = vst.msk [vmem:[#allocation2] sm:$0xff] %vm335, %v333
        %337 = vst.msk [vmem:[#allocation2 + $0x8] sm:$0xff] %vm335, %v334
        %vm338 = vcmask 7168
        %339 = vst.msk [vmem:[#allocation3] sm:$0xff] %vm338, -inf
        %340 = vst.msk [vmem:[#allocation3 + $0x8] sm:$0xff] %vm338, -inf
        %341 = vst.msk [vmem:[#allocation4] sm:$0xff] %vm338, 0.0
        %342 = vst.msk [vmem:[#allocation4 + $0x8] sm:$0xff] %vm338, 0.0
        %343 = vst.msk [vmem:[#allocation5] sm:$0xff] %vm335, 0.0
        %344 = vst.msk [vmem:[#allocation5 + $0x8] sm:$0xff] %vm335, 0.0
      $region36: #{openelm_attention.3} parent=31 // pred_fallthru
        _
      %v345 = vld [vmem:[%s302] sm:$0xff]
      %v346 = vld [vmem:[%s313] sm:$0xff]
      %v347 = vld [vmem:[#allocation2] sm:$0xff]
      %v348 = vld [vmem:[#allocation2 + $0x8] sm:$0xff]
      %vm349 = vcmask 261120
      %v351 = vsel %vm349, %v347, 0
      %v354 = vsel %vm349, %v348, 0
      %v357 = vsel %vm349, %v345, 0
      %359 = vmatpush.xpose.msra.mxu0 0.0
      %360 = vmatpush.xpose.msra.mxu0 0.0
      %361 = vmatpush.xpose.msra.mxu0 0.0
      %362 = vmatpush.xpose.msra.mxu0 0.0
      %363 = vmatpush.xpose.msra.mxu0 0.0
      %364 = vmatpush.xpose.msra.mxu0 0.0
      %365 = vmatpush.xpose.msra.mxu0 0.0
      %366 = vmatpush.xpose.msra.mxu0 0.0
      %367 = vmatpush.xpose.msra.mxu0 0.0
      %368 = vmatpush.xpose.msra.mxu0 0.0
      %369 = vmatpush.xpose.msra.mxu0 0.0
      %370 = vmatpush.xpose.msra.mxu0 0.0
      %371 = vmatpush.xpose.msra.mxu0 0.0
      %372 = vmatpush.xpose.msra.mxu0 0.0
      %373 = vmatpush.xpose.msra.mxu0 0.0
      %374 = vmatpush.xpose.msra.mxu0 %v357
      %375 = vmatmul.f32.gmra.mxu0 %v351
      %v376 = vpop.f32.mrf.mxu0
      %v377 = vadd.f32 0.0, %v376
      %378 = vmatmul.f32.gmra.mxu0 %v354
      %v379 = vpop.f32.mrf.mxu0
      %v380 = vadd.f32 0.0, %v379
      %381 = vdwg.mxu0
      %v382 = vld [vmem:[#allocation3] sm:$0xff]
      %v383 = vld [vmem:[#allocation3 + $0x8] sm:$0xff]
      %vm384 = vcmask 64512
      %v385 = vsel %vm384, %v377, -inf
      %386 = vmax.xlane.f32.xlu0 %v385
      %v387 = vpop.xlane.xlu0 %386
      %v388 = vsel %vm384, %v380, -inf
      %389 = vmax.xlane.f32.xlu0 %v388
      %v390 = vpop.xlane.xlu0 %389
      %v391 = vmax.f32 %v382, %v387
      %v392 = vmax.f32 %v383, %v390
      %v393 = vsub.f32 %v382, %v391
      %v394 = vsub.f32 %v383, %v392
      %v395 = vmul.f32 %v393, 1.442695
      %v396 = vpow.pop %v395
      %v397 = vmul.f32 %v394, 1.442695
      %v398 = vpow.pop %v397
      %400 = vset.pattern.permute.xlu0 0
      %401 = vperm.xlu0 %400, %v391
      %v402 = vpop.permute.xlu0 %401
      %405 = vset.pattern.permute.xlu0 0
      %406 = vperm.xlu0 %405, %v392
      %v407 = vpop.permute.xlu0 %406
      %v409 = vsub.f32 %v377, %v402
      %v410 = vsub.f32 %v380, %v407
      %v411 = vmul.f32 %v409, 1.442695
      %v412 = vpow.pop %v411
      %v413 = vmul.f32 %v410, 1.442695
      %v414 = vpow.pop %v413
      %v415 = vld [vmem:[#allocation4] sm:$0xff]
      %v416 = vld [vmem:[#allocation4 + $0x8] sm:$0xff]
      %v417 = vmul.f32 %v396, %v415
      %v418 = vmul.f32 %v398, %v416
      %v419 = vsel %vm384, %v412, 0.0
      %420 = vadd.xlane.f32.xlu0 %v419
      %v421 = vpop.xlane.xlu0 %420
      %v422 = vsel %vm384, %v414, 0.0
      %423 = vadd.xlane.f32.xlu0 %v422
      %v424 = vpop.xlane.xlu0 %423
      %v425 = vadd.f32 %v417, %v421
      %v426 = vadd.f32 %v418, %v424
      %vm427 = vcmask 7168
      %428 = vst.msk [vmem:[#allocation4] sm:$0xff] %vm427, %v425
      %429 = vst.msk [vmem:[#allocation4 + $0x8] sm:$0xff] %vm427, %v426
      %v430 = vld [vmem:[#allocation5] sm:$0xff]
      %v431 = vld [vmem:[#allocation5 + $0x8] sm:$0xff]
      %433 = vset.pattern.permute.xlu0 0
      %434 = vperm.xlu0 %433, %v396
      %v435 = vpop.permute.xlu0 %434
      %438 = vset.pattern.permute.xlu0 0
      %439 = vperm.xlu0 %438, %v398
      %v440 = vpop.permute.xlu0 %439
      %v442 = vmul.f32 %v435, %v430
      %v443 = vmul.f32 %v440, %v431
      %v445 = vsel %vm384, %v412, 0
      %v448 = vsel %vm384, %v414, 0
      %450 = vmatpush.msra.mxu0 0.0
      %451 = vmatpush.msra.mxu0 0.0
      %452 = vmatpush.msra.mxu0 0.0
      %453 = vmatpush.msra.mxu0 0.0
      %454 = vmatpush.msra.mxu0 0.0
      %455 = vmatpush.msra.mxu0 0.0
      %456 = vmatpush.msra.mxu0 0.0
      %457 = vmatpush.msra.mxu0 0.0
      %458 = vmatpush.msra.mxu0 0.0
      %459 = vmatpush.msra.mxu0 0.0
      %460 = vmatpush.msra.mxu0 0.0
      %461 = vmatpush.msra.mxu0 0.0
      %462 = vmatpush.msra.mxu0 0.0
      %463 = vmatpush.msra.mxu0 0.0
      %464 = vmatpush.msra.mxu0 0.0
      %465 = vmatpush.msra.mxu0 %v346
      %466 = vmatmul.f32.gmra.mxu0 %v445
      %v467 = vpop.f32.mrf.mxu0
      %v468 = vadd.f32 0.0, %v467
      %469 = vmatmul.f32.gmra.mxu0 %v448
      %v470 = vpop.f32.mrf.mxu0
      %v471 = vadd.f32 0.0, %v470
      %472 = vdwg.mxu0
      %v473 = vadd.f32 %v442, %v468
      %v474 = vadd.f32 %v443, %v471
      %475 = vst.msk [vmem:[#allocation5] sm:$0xff] %vm349, %v473
      %476 = vst.msk [vmem:[#allocation5 + $0x8] sm:$0xff] %vm349, %v474
      %477 = vst.msk [vmem:[#allocation3] sm:$0xff] %vm427, %v391
      %478 = vst.msk [vmem:[#allocation3 + $0x8] sm:$0xff] %vm427, %v392
      // Predicated region
      $region37: #{openelm_attention.3} parent=31 // pred_check
        %p479 = pneg %p327
      $region38: #{openelm_attention.3} parent=31 // pred_check_branch
        %481 = sbr.rel (%p479) target = $region40
      $region39: #{openelm_attention.3} parent=31 // pred_region
        %v482 = vld [vmem:[#allocation4] sm:$0xff]
        %v483 = vld [vmem:[#allocation4 + $0x8] sm:$0xff]
        %v484 = vrcp.pop %v482
        %v485 = vmul.f32 %v482, %v484
        %v486 = vsub.f32 1.0, %v485
        %v487 = vmul.f32 %v484, %v486
        %v488 = vadd.f32 %v484, %v487
        %vm489 = vweird.f32 %v482
        %vm490 = vweird.f32 %v484
        %vm491 = vmor %vm489, %vm490
        %v492 = vsel %vm491, %v484, %v488
        %v493 = vand.u32 2147483647, %v482
        %vm494 = vcmp.eq.f32.partialorder %v493, 8.507059e+37
        %v495 = vand.u32 %v482, 2147483648
        %v496 = vor.u32 1.1754944e-38, %v495
        %v497 = vsel %vm494, %v496, %v492
        %v498 = vrcp.pop %v483
        %v499 = vmul.f32 %v483, %v498
        %v500 = vsub.f32 1.0, %v499
        %v501 = vmul.f32 %v498, %v500
        %v502 = vadd.f32 %v498, %v501
        %vm503 = vweird.f32 %v483
        %vm504 = vweird.f32 %v498
        %vm505 = vmor %vm503, %vm504
        %v506 = vsel %vm505, %v498, %v502
        %v507 = vand.u32 2147483647, %v483
        %vm508 = vcmp.eq.f32.partialorder %v507, 8.507059e+37
        %v509 = vand.u32 %v483, 2147483648
        %v510 = vor.u32 1.1754944e-38, %v509
        %v511 = vsel %vm508, %v510, %v506
        %v512 = vld [vmem:[#allocation5] sm:$0xff]
        %v513 = vld [vmem:[#allocation5 + $0x8] sm:$0xff]
        %515 = vset.pattern.permute.xlu0 0
        %516 = vperm.xlu0 %515, %v497
        %v517 = vpop.permute.xlu0 %516
        %520 = vset.pattern.permute.xlu0 0
        %521 = vperm.xlu0 %520, %v511
        %v522 = vpop.permute.xlu0 %521
        %v524 = vmul.f32 %v512, %v517
        %v525 = vmul.f32 %v513, %v522
        %526 = vst.msk [vmem:[%s325] sm:$0xff] %vm349, %v524
        %527 = vst.msk [vmem:[%s325 + $0x8] sm:$0xff] %vm349, %v525
      $region40: #{openelm_attention.3} parent=31 // pred_fallthru
        _
      %s528 = smul.u32 2, %s21
      %p529 = scmp.lt.s32.totalorder %s20, 1
      %s530 = scalar_select %p529, %s20, 1
      %p531 = scmp.lt.s32.totalorder %s528, 3
      %s532 = scalar_select %p531, %s528, 3
      %p533 = scmp.lt.s32.totalorder %s22, 0
      %s534 = scalar_select %p533, %s22, 0
      %s535 = sadd.s32 %s534, %s532
      %s536 = smul.addr %s530, 4
      %s537 = sadd.s32 %s535, %s536
      %s538 = smul.addr %s537, 8
      %s539 = scalar_lea.vmem %s3, %s538
      // Predicated region
      $region41: #{openelm_attention.3} parent=31 // pred_check
        %p540 = pneg %p152
      $region42: #{openelm_attention.3} parent=31 // pred_check_branch
        %542 = sbr.rel (%p540) target = $region44
      $region43: #{openelm_attention.3} parent=31 // pred_region
        %s543 = smul.u32 2, %s21
      $region44: #{openelm_attention.3} parent=31 // pred_fallthru
        _
    $region32: #{openelm_attention.3} parent=5 // pred_fallthru
      _
    %p544 = scmp.le.s32.totalorder 2, %s9
    // Predicated region
    $region45: #{openelm_attention.3} parent=5 // pred_check
      %p545 = pneg %p544
    $region46: #{openelm_attention.3} parent=5 // pred_check_branch
      %547 = sbr.rel (%p545) target = $region48
    $region47: #{openelm_attention.3} parent=5 // pred_region
      %s548 = ssub.s32 %s9, 2
      // Predicated region
      $region49: #{openelm_attention.3} parent=47 // pred_check
        %p549 = pneg %p158
      $region50: #{openelm_attention.3} parent=47 // pred_check_branch
        %551 = sbr.rel (%p549) target = $region52
      $region51: #{openelm_attention.3} parent=47 // pred_region
        %s552 = smul.u32 2, %s25
        %p553 = scmp.lt.s32.totalorder %s24, 1
        %s554 = scalar_select %p553, %s24, 1
        %p555 = scmp.lt.s32.totalorder %s552, 3
        %s556 = scalar_select %p555, %s552, 3
        %p557 = scmp.lt.s32.totalorder %s26, 0
        %s558 = scalar_select %p557, %s26, 0
        %s559 = sadd.s32 %s558, %s556
        %s560 = smul.addr %s554, 4
        %s561 = sadd.s32 %s559, %s560
        %s562 = smul.addr %s561, 8
        %s563 = scalar_lea.vmem %s3, %s562
      $region52: #{openelm_attention.3} parent=47 // pred_fallthru
        _
    $region48: #{openelm_attention.3} parent=5 // pred_fallthru
      _
  $region6: #{openelm_attention.3} parent=0 // loop_footer
    %s13 = sadd.s32 1, %s9
  $region7: #{openelm_attention.3} parent=0 // loop_footer_branch
    %8 = sbr.rel target = $region3
  $region8: #{openelm_attention.3} parent=0 // loop_exit
    _

</llo_original>
